<compile_context>
chip_gen: v7x
topology: tpu7x:2x2x1
jax: 0.10.0
libtpu: 0.0.40
codegen_flags: <defaults>
</compile_context>

<pallas_src>
import jax
import jax.numpy as jnp
from jax.experimental import pallas as pl
from jax.experimental.pallas import tpu as pltpu

_EPS = 1e-5


def _round_up(x, m):
    return ((x + m - 1) // m) * m


# --------------------------------------------------------------------------
# Kernel: one row-tile of the whole head. Everything is padded & BN-folded.
# --------------------------------------------------------------------------
def _net_kernel(cnn_ref, meta_ref,
                fc_w, fc_b,
                m1_w, m1_b,
                m2_w, m2_b,
                m3_w, m3_b,
                t0_w, t0_b,
                t4_w, t4_b,
                out_w, out_b,
                o_ref):
    f32 = jnp.float32
    bf16 = jnp.bfloat16

    # ---- arch(x) tail: replaced fc Linear(512 -> 500 [pad 512]); no BN/ReLU ----
    cnn = jnp.dot(cnn_ref[...], fc_w[...], preferred_element_type=f32) + fc_b[...]

    # ---- meta MLP: (Linear [BN folded] -> ReLU -> Dropout=identity) x3 ----
    h = jnp.dot(meta_ref[...], m1_w[...], preferred_element_type=f32) + m1_b[...]
    h = jnp.maximum(h, 0.0).astype(bf16)                        # [bm, 512]
    h = jnp.dot(h, m2_w[...], preferred_element_type=f32) + m2_b[...]
    h = jnp.maximum(h, 0.0).astype(bf16)                        # [bm, 256]
    h = jnp.dot(h, m3_w[...], preferred_element_type=f32) + m3_b[...]
    meta_feat = jnp.maximum(h, 0.0).astype(bf16)                # [bm, 256]

    # ---- together0 on concat(cnn, meta): single fused K=768 matmul;
    #      BN(together1) folded; both halves are 128-lane multiples ----
    feat = jnp.concatenate([cnn.astype(bf16), meta_feat], axis=-1)   # [bm, 768]
    t = jnp.dot(feat, t0_w[...], preferred_element_type=f32) + t0_b[...]
    t = jnp.maximum(t, 0.0).astype(bf16)                        # [bm, 128]

    # ---- together4 + BN(together5) folded + ReLU (+Dropout identity) ----
    t = jnp.dot(t, t4_w[...], preferred_element_type=f32) + t4_b[...]
    t = jnp.maximum(t, 0.0).astype(bf16)                        # [bm, 128]

    # ---- output Linear(25 -> 1), lane-padded to 128 (col 0 is the logit) ----
    o_ref[...] = jnp.dot(t, out_w[...], preferred_element_type=f32) + out_b[...]


# --------------------------------------------------------------------------
# One-time parameter preparation: BN folding, zero-padding, bf16 casting.
# --------------------------------------------------------------------------
def _fold_bn_into_linear(w, b, bn):
    gamma, beta, mean, var = bn
    scale = gamma / jnp.sqrt(var + _EPS)
    return w * scale[None, :], b * scale + (beta - mean * scale)


def _pad_w(w, rows, cols):
    r, c = w.shape
    return jnp.pad(w, ((0, rows - r), (0, cols - c))).astype(jnp.bfloat16)


def _pad_b(b, cols):
    return jnp.pad(b, (0, cols - b.shape[0])).reshape(1, cols).astype(jnp.float32)


def prepare_params(params, n_meta_features):
    """Fold eval-mode BN into Linears, pad to (8,128)-friendly shapes, cast bf16."""
    p = params
    meta_pad = _round_up(max(n_meta_features, 1), 128)

    m1_w, m1_b = _fold_bn_into_linear(p["m1_w"], p["m1_b"], p["bn1"])
    m2_w, m2_b = _fold_bn_into_linear(p["m2_w"], p["m2_b"], p["bn2"])
    m3_w, m3_b = _fold_bn_into_linear(p["m3_w"], p["m3_b"], p["bn3"])
    t0_w, t0_b = _fold_bn_into_linear(p["t0_w"], p["t0_b"], p["bnt1"])
    t4_w, t4_b = _fold_bn_into_linear(p["t4_w"], p["t4_b"], p["bnt5"])

    # Fuse the concat(500+250) weight into one padded (768, 128) block:
    # rows 0..499 -> cnn half (padded to 512), rows 500..749 -> meta half (padded to 256).
    t0w_cnn = jnp.pad(t0_w[:500, :], ((0, 512 - 500), (0, 128 - t0_w.shape[1])))
    t0w_meta = jnp.pad(t0_w[500:, :], ((0, 256 - 250), (0, 128 - t0_w.shape[1])))
    t0_w_cat = jnp.concatenate([t0w_cnn, t0w_meta], axis=0).astype(jnp.bfloat16)

    return dict(
        fc_w=_pad_w(p["fc_w"], 512, 512),        fc_b=_pad_b(p["fc_b"], 512),
        m1_w=_pad_w(m1_w, meta_pad, 512),        m1_b=_pad_b(m1_b, 512),
        m2_w=_pad_w(m2_w, 512, 256),             m2_b=_pad_b(m2_b, 256),
        m3_w=_pad_w(m3_w, 256, 256),             m3_b=_pad_b(m3_b, 256),
        t0_w=t0_w_cat,                           t0_b=_pad_b(t0_b, 128),
        t4_w=_pad_w(t4_w, 128, 128),             t4_b=_pad_b(t4_b, 128),
        out_w=_pad_w(p["out_w"], 128, 128),      out_b=_pad_b(p["out_b"], 128),
    )


_WEIGHT_KEYS = ("fc_w", "fc_b", "m1_w", "m1_b", "m2_w", "m2_b",
                "m3_w", "m3_b", "t0_w", "t0_b",
                "t4_w", "t4_b", "out_w", "out_b")


# --------------------------------------------------------------------------
# Forward wrapper.
# --------------------------------------------------------------------------
def net_forward(x_nchw, meta, prepared):
    """x_nchw: [B, 512, H, W] backbone feature map (NCHW); meta: [B, n_meta]."""
    B, C, H, W = x_nchw.shape
    assert C == 512, "replaced ResNet fc expects 512-channel pooled features"

    # Global average pool in the wrapper over a single contiguous trailing axis
    # (lane-dense reduce); skip the cast if the backbone output is already f32.
    x32 = x_nchw if x_nchw.dtype == jnp.float32 else x_nchw.astype(jnp.float32)
    pooled = jnp.mean(x32.reshape(B, C, H * W), axis=-1)                # [B, 512]

    meta_pad = prepared["m1_w"].shape[0]

    # Row tiling: big tiles (up to 512 rows) to amortize per-step overhead and
    # keep MXU LHS streams long; for B >= 16 force >= 2 grid steps so the
    # "parallel" axis shards across v7x's two TensorCores.
    if B >= 16:
        bm = min(512, _round_up(pl.cdiv(B, 2), 8))
    else:
        bm = _round_up(max(B, 1), 8)
    B_pad = _round_up(B, bm)

    pooled_p = jnp.pad(pooled, ((0, B_pad - B), (0, 0))).astype(jnp.bfloat16)
    meta_p = jnp.pad(meta.astype(jnp.float32),
                     ((0, B_pad - B), (0, meta_pad - meta.shape[1]))
                     ).astype(jnp.bfloat16)

    def row_spec(n):
        # Row tiles / output: default double-buffered pipelining.
        return pl.BlockSpec((bm, n), lambda i: (i, 0))

    def weight_spec(shape):
        # Grid-invariant operands: single-buffered, resident in VMEM.
        return pl.BlockSpec(shape, lambda i: (0, 0), pipeline_mode=pl.Buffered(1))

    weights = [prepared[k] for k in _WEIGHT_KEYS]
    in_specs = ([row_spec(512), row_spec(meta_pad)]
                + [weight_spec(w.shape) for w in weights])

    out = pl.pallas_call(
        _net_kernel,
        out_shape=jax.ShapeDtypeStruct((B_pad, 128), jnp.float32),
        grid=(B_pad // bm,),
        in_specs=in_specs,
        out_specs=row_spec(128),
        compiler_params=pltpu.CompilerParams(
            dimension_semantics=("parallel",),
            vmem_limit_bytes=32 * 1024 * 1024),
    )(pooled_p, meta_p, *weights)

    return out[:B, :1]                                                   # [B, 1]


# --------------------------------------------------------------------------
# Parameter init (PyTorch-style raw params; folding/padding happens once later)
# --------------------------------------------------------------------------
def init_params(key, n_meta_features):
    def linear(key, fan_in, fan_out):
        kw, kb = jax.random.split(key)
        bound = 1.0 / jnp.sqrt(fan_in)
        w = jax.random.uniform(kw, (fan_in, fan_out), jnp.float32, -bound, bound)
        b = jax.random.uniform(kb, (fan_out,), jnp.float32, -bound, bound)
        return w, b

    def bn(key, n):
        k1, k2, k3, k4 = jax.random.split(key, 4)
        gamma = jax.random.uniform(k1, (n,), jnp.float32, 0.5, 1.5)
        beta = jax.random.uniform(k2, (n,), jnp.float32, -0.1, 0.1)
        mean = jax.random.uniform(k3, (n,), jnp.float32, -0.2, 0.2)
        var = jax.random.uniform(k4, (n,), jnp.float32, 0.5, 1.5)
        return (gamma, beta, mean, var)

    keys = jax.random.split(key, 12)
    params = {}
    params["fc_w"], params["fc_b"] = linear(keys[0], 512, 500)          # arch.fc
    params["m1_w"], params["m1_b"] = linear(keys[1], n_meta_features, 500)
    params["bn1"] = bn(keys[2], 500)
    params["m2_w"], params["m2_b"] = linear(keys[3], 500, 250)
    params["bn2"] = bn(keys[4], 250)
    params["m3_w"], params["m3_b"] = linear(keys[5], 250, 250)
    params["bn3"] = bn(keys[6], 250)
    params["t0_w"], params["t0_b"] = linear(keys[7], 750, 100)          # together0
    params["bnt1"] = bn(keys[8], 100)                                   # together1
    params["t4_w"], params["t4_b"] = linear(keys[9], 100, 25)           # together4
    params["bnt5"] = bn(keys[10], 25)                                   # together5
    params["out_w"], params["out_b"] = linear(keys[11], 25, 1)          # ouput
    return params


if __name__ == "__main__":
    key = jax.random.PRNGKey(0)
    k_x, k_meta, k_param = jax.random.split(key, 3)

    B, C, H, W = 2, 512, 4, 4          # small ResNet-style feature map (NCHW)
    n_meta_features = 8

    x = jax.random.normal(k_x, (B, C, H, W), jnp.float32)
    meta = jax.random.normal(k_meta, (B, n_meta_features), jnp.float32)

    params = init_params(k_param, n_meta_features)
    prepared = prepare_params(params, n_meta_features)   # one-time fold/pad/cast

    fwd = jax.jit(net_forward)
    out = fwd(x, meta, prepared)
    out = jax.block_until_ready(out)

    assert out.shape == (B, 1) and out.dtype == jnp.float32
    print("KERNEL_OK")
</pallas_src>

<mosaic_0001>
module attributes {stable_mosaic.version = 11 : i64} {
  func.func @_net_kernel(%arg0: i32, %arg1: memref<8x512xbf16, #tpu.memory_space<vmem>>, %arg2: memref<8x128xbf16, #tpu.memory_space<vmem>>, %arg3: memref<512x512xbf16, #tpu.memory_space<vmem>>, %arg4: memref<1x512xf32, #tpu.memory_space<vmem>>, %arg5: memref<128x512xbf16, #tpu.memory_space<vmem>>, %arg6: memref<1x512xf32, #tpu.memory_space<vmem>>, %arg7: memref<512x256xbf16, #tpu.memory_space<vmem>>, %arg8: memref<1x256xf32, #tpu.memory_space<vmem>>, %arg9: memref<256x256xbf16, #tpu.memory_space<vmem>>, %arg10: memref<1x256xf32, #tpu.memory_space<vmem>>, %arg11: memref<768x128xbf16, #tpu.memory_space<vmem>>, %arg12: memref<1x128xf32, #tpu.memory_space<vmem>>, %arg13: memref<128x128xbf16, #tpu.memory_space<vmem>>, %arg14: memref<1x128xf32, #tpu.memory_space<vmem>>, %arg15: memref<128x128xbf16, #tpu.memory_space<vmem>>, %arg16: memref<1x128xf32, #tpu.memory_space<vmem>>, %arg17: memref<8x128xf32, #tpu.memory_space<vmem>>) attributes {dimension_semantics = [#tpu.dimension_semantics<parallel>], iteration_bounds = array<i64: 1>, scalar_prefetch = 0 : i64, scratch_operands = 0 : i64, tpu.core_type = #tpu.core_type<tc>, window_params = [{transform_indices = @transform_0, window_bounds = array<i64: 8, 512>}, {transform_indices = @transform_1, window_bounds = array<i64: 8, 128>}, {pipeline_mode = #tpu.pipeline_mode<synchronous>, transform_indices = @transform_2, window_bounds = array<i64: 512, 512>}, {pipeline_mode = #tpu.pipeline_mode<synchronous>, transform_indices = @transform_3, window_bounds = array<i64: 1, 512>}, {pipeline_mode = #tpu.pipeline_mode<synchronous>, transform_indices = @transform_4, window_bounds = array<i64: 128, 512>}, {pipeline_mode = #tpu.pipeline_mode<synchronous>, transform_indices = @transform_5, window_bounds = array<i64: 1, 512>}, {pipeline_mode = #tpu.pipeline_mode<synchronous>, transform_indices = @transform_6, window_bounds = array<i64: 512, 256>}, {pipeline_mode = #tpu.pipeline_mode<synchronous>, transform_indices = @transform_7, window_bounds = array<i64: 1, 256>}, {pipeline_mode = #tpu.pipeline_mode<synchronous>, transform_indices = @transform_8, window_bounds = array<i64: 256, 256>}, {pipeline_mode = #tpu.pipeline_mode<synchronous>, transform_indices = @transform_9, window_bounds = array<i64: 1, 256>}, {pipeline_mode = #tpu.pipeline_mode<synchronous>, transform_indices = @transform_10, window_bounds = array<i64: 768, 128>}, {pipeline_mode = #tpu.pipeline_mode<synchronous>, transform_indices = @transform_11, window_bounds = array<i64: 1, 128>}, {pipeline_mode = #tpu.pipeline_mode<synchronous>, transform_indices = @transform_12, window_bounds = array<i64: 128, 128>}, {pipeline_mode = #tpu.pipeline_mode<synchronous>, transform_indices = @transform_13, window_bounds = array<i64: 1, 128>}, {pipeline_mode = #tpu.pipeline_mode<synchronous>, transform_indices = @transform_14, window_bounds = array<i64: 128, 128>}, {pipeline_mode = #tpu.pipeline_mode<synchronous>, transform_indices = @transform_15, window_bounds = array<i64: 1, 128>}, {transform_indices = @transform_16, window_bounds = array<i64: 8, 128>}]} {
    %c0 = arith.constant 0 : index
    %c0_0 = arith.constant 0 : index
    %0 = vector.load %arg1[%c0, %c0_0] : memref<8x512xbf16, #tpu.memory_space<vmem>>, vector<8x512xbf16>
    %c0_1 = arith.constant 0 : index
    %c0_2 = arith.constant 0 : index
    %1 = vector.load %arg3[%c0_1, %c0_2] : memref<512x512xbf16, #tpu.memory_space<vmem>>, vector<512x512xbf16>
    %cst = arith.constant dense<0.000000e+00> : vector<8x512xf32>
    %2 = tpu.matmul %0, %1, %cst {dimension_numbers = #tpu.dot_dimension_numbers<[1], [0], [0], [1], [0, 0, 1, 1], [], []>} : vector<8x512xbf16>, vector<512x512xbf16>, vector<8x512xf32> -> vector<8x512xf32>
    %c0_3 = arith.constant 0 : index
    %c0_4 = arith.constant 0 : index
    %3 = vector.load %arg4[%c0_3, %c0_4] : memref<1x512xf32, #tpu.memory_space<vmem>>, vector<1x512xf32>
    %4 = vector.broadcast %3 : vector<1x512xf32> to vector<8x512xf32>
    %5 = arith.addf %2, %4 : vector<8x512xf32>
    %c0_5 = arith.constant 0 : index
    %c0_6 = arith.constant 0 : index
    %6 = vector.load %arg2[%c0_5, %c0_6] : memref<8x128xbf16, #tpu.memory_space<vmem>>, vector<8x128xbf16>
    %c0_7 = arith.constant 0 : index
    %c0_8 = arith.constant 0 : index
    %7 = vector.load %arg5[%c0_7, %c0_8] : memref<128x512xbf16, #tpu.memory_space<vmem>>, vector<128x512xbf16>
    %cst_9 = arith.constant dense<0.000000e+00> : vector<8x512xf32>
    %8 = tpu.matmul %6, %7, %cst_9 {dimension_numbers = #tpu.dot_dimension_numbers<[1], [0], [0], [1], [0, 0, 1, 1], [], []>} : vector<8x128xbf16>, vector<128x512xbf16>, vector<8x512xf32> -> vector<8x512xf32>
    %c0_10 = arith.constant 0 : index
    %c0_11 = arith.constant 0 : index
    %9 = vector.load %arg6[%c0_10, %c0_11] : memref<1x512xf32, #tpu.memory_space<vmem>>, vector<1x512xf32>
    %10 = vector.broadcast %9 : vector<1x512xf32> to vector<8x512xf32>
    %11 = arith.addf %8, %10 : vector<8x512xf32>
    %cst_12 = arith.constant 0.000000e+00 : f32
    %12 = vector.broadcast %cst_12 : f32 to vector<8x512xf32>
    %13 = arith.maximumf %11, %12 : vector<8x512xf32>
    %14 = arith.truncf %13 : vector<8x512xf32> to vector<8x512xbf16>
    %c0_13 = arith.constant 0 : index
    %c0_14 = arith.constant 0 : index
    %15 = vector.load %arg7[%c0_13, %c0_14] : memref<512x256xbf16, #tpu.memory_space<vmem>>, vector<512x256xbf16>
    %cst_15 = arith.constant dense<0.000000e+00> : vector<8x256xf32>
    %16 = tpu.matmul %14, %15, %cst_15 {dimension_numbers = #tpu.dot_dimension_numbers<[1], [0], [0], [1], [0, 0, 1, 1], [], []>} : vector<8x512xbf16>, vector<512x256xbf16>, vector<8x256xf32> -> vector<8x256xf32>
    %c0_16 = arith.constant 0 : index
    %c0_17 = arith.constant 0 : index
    %17 = vector.load %arg8[%c0_16, %c0_17] : memref<1x256xf32, #tpu.memory_space<vmem>>, vector<1x256xf32>
    %18 = vector.broadcast %17 : vector<1x256xf32> to vector<8x256xf32>
    %19 = arith.addf %16, %18 : vector<8x256xf32>
    %cst_18 = arith.constant 0.000000e+00 : f32
    %20 = vector.broadcast %cst_18 : f32 to vector<8x256xf32>
    %21 = arith.maximumf %19, %20 : vector<8x256xf32>
    %22 = arith.truncf %21 : vector<8x256xf32> to vector<8x256xbf16>
    %c0_19 = arith.constant 0 : index
    %c0_20 = arith.constant 0 : index
    %23 = vector.load %arg9[%c0_19, %c0_20] : memref<256x256xbf16, #tpu.memory_space<vmem>>, vector<256x256xbf16>
    %cst_21 = arith.constant dense<0.000000e+00> : vector<8x256xf32>
    %24 = tpu.matmul %22, %23, %cst_21 {dimension_numbers = #tpu.dot_dimension_numbers<[1], [0], [0], [1], [0, 0, 1, 1], [], []>} : vector<8x256xbf16>, vector<256x256xbf16>, vector<8x256xf32> -> vector<8x256xf32>
    %c0_22 = arith.constant 0 : index
    %c0_23 = arith.constant 0 : index
    %25 = vector.load %arg10[%c0_22, %c0_23] : memref<1x256xf32, #tpu.memory_space<vmem>>, vector<1x256xf32>
    %26 = vector.broadcast %25 : vector<1x256xf32> to vector<8x256xf32>
    %27 = arith.addf %24, %26 : vector<8x256xf32>
    %cst_24 = arith.constant 0.000000e+00 : f32
    %28 = vector.broadcast %cst_24 : f32 to vector<8x256xf32>
    %29 = arith.maximumf %27, %28 : vector<8x256xf32>
    %30 = arith.truncf %29 : vector<8x256xf32> to vector<8x256xbf16>
    %31 = arith.truncf %5 : vector<8x512xf32> to vector<8x512xbf16>
    %32 = tpu.concatenate %31, %30 in 1 : vector<8x512xbf16>, vector<8x256xbf16> -> vector<8x768xbf16>
    %c0_25 = arith.constant 0 : index
    %c0_26 = arith.constant 0 : index
    %33 = vector.load %arg11[%c0_25, %c0_26] : memref<768x128xbf16, #tpu.memory_space<vmem>>, vector<768x128xbf16>
    %cst_27 = arith.constant dense<0.000000e+00> : vector<8x128xf32>
    %34 = tpu.matmul %32, %33, %cst_27 {dimension_numbers = #tpu.dot_dimension_numbers<[1], [0], [0], [1], [0, 0, 1, 1], [], []>} : vector<8x768xbf16>, vector<768x128xbf16>, vector<8x128xf32> -> vector<8x128xf32>
    %c0_28 = arith.constant 0 : index
    %c0_29 = arith.constant 0 : index
    %35 = vector.load %arg12[%c0_28, %c0_29] : memref<1x128xf32, #tpu.memory_space<vmem>>, vector<1x128xf32>
    %36 = vector.broadcast %35 : vector<1x128xf32> to vector<8x128xf32>
    %37 = arith.addf %34, %36 : vector<8x128xf32>
    %cst_30 = arith.constant 0.000000e+00 : f32
    %38 = vector.broadcast %cst_30 : f32 to vector<8x128xf32>
    %39 = arith.maximumf %37, %38 : vector<8x128xf32>
    %40 = arith.truncf %39 : vector<8x128xf32> to vector<8x128xbf16>
    %c0_31 = arith.constant 0 : index
    %c0_32 = arith.constant 0 : index
    %41 = vector.load %arg13[%c0_31, %c0_32] : memref<128x128xbf16, #tpu.memory_space<vmem>>, vector<128x128xbf16>
    %cst_33 = arith.constant dense<0.000000e+00> : vector<8x128xf32>
    %42 = tpu.matmul %40, %41, %cst_33 {dimension_numbers = #tpu.dot_dimension_numbers<[1], [0], [0], [1], [0, 0, 1, 1], [], []>} : vector<8x128xbf16>, vector<128x128xbf16>, vector<8x128xf32> -> vector<8x128xf32>
    %c0_34 = arith.constant 0 : index
    %c0_35 = arith.constant 0 : index
    %43 = vector.load %arg14[%c0_34, %c0_35] : memref<1x128xf32, #tpu.memory_space<vmem>>, vector<1x128xf32>
    %44 = vector.broadcast %43 : vector<1x128xf32> to vector<8x128xf32>
    %45 = arith.addf %42, %44 : vector<8x128xf32>
    %cst_36 = arith.constant 0.000000e+00 : f32
    %46 = vector.broadcast %cst_36 : f32 to vector<8x128xf32>
    %47 = arith.maximumf %45, %46 : vector<8x128xf32>
    %48 = arith.truncf %47 : vector<8x128xf32> to vector<8x128xbf16>
    %c0_37 = arith.constant 0 : index
    %c0_38 = arith.constant 0 : index
    %49 = vector.load %arg15[%c0_37, %c0_38] : memref<128x128xbf16, #tpu.memory_space<vmem>>, vector<128x128xbf16>
    %cst_39 = arith.constant dense<0.000000e+00> : vector<8x128xf32>
    %50 = tpu.matmul %48, %49, %cst_39 {dimension_numbers = #tpu.dot_dimension_numbers<[1], [0], [0], [1], [0, 0, 1, 1], [], []>} : vector<8x128xbf16>, vector<128x128xbf16>, vector<8x128xf32> -> vector<8x128xf32>
    %c0_40 = arith.constant 0 : index
    %c0_41 = arith.constant 0 : index
    %51 = vector.load %arg16[%c0_40, %c0_41] : memref<1x128xf32, #tpu.memory_space<vmem>>, vector<1x128xf32>
    %52 = vector.broadcast %51 : vector<1x128xf32> to vector<8x128xf32>
    %53 = arith.addf %50, %52 : vector<8x128xf32>
    %c0_42 = arith.constant 0 : index
    %c0_43 = arith.constant 0 : index
    %54 = vector.load %arg17[%c0_42, %c0_43] : memref<8x128xf32, #tpu.memory_space<vmem>>, vector<8x128xf32>
    tpu.vector_store %arg17[%c0_42, %c0_43], %53 {strides = array<i32>} : memref<8x128xf32, #tpu.memory_space<vmem>>, vector<8x128xf32>,
    return
  }
  func.func @transform_0(%arg0: i32) -> (i32, i32) {
    %c0_i32 = arith.constant 0 : i32
    %c0_i32_0 = arith.constant 0 : i32
    return %arg0, %c0_i32 : i32, i32
  }
  func.func @transform_1(%arg0: i32) -> (i32, i32) {
    %c0_i32 = arith.constant 0 : i32
    %c0_i32_0 = arith.constant 0 : i32
    return %arg0, %c0_i32 : i32, i32
  }
  func.func @transform_2(%arg0: i32) -> (i32, i32) {
    %c0_i32 = arith.constant 0 : i32
    %c0_i32_0 = arith.constant 0 : i32
    %c0_i32_1 = arith.constant 0 : i32
    return %c0_i32, %c0_i32_0 : i32, i32
  }
  func.func @transform_3(%arg0: i32) -> (i32, i32) {
    %c0_i32 = arith.constant 0 : i32
    %c0_i32_0 = arith.constant 0 : i32
    %c0_i32_1 = arith.constant 0 : i32
    return %c0_i32, %c0_i32_0 : i32, i32
  }
  func.func @transform_4(%arg0: i32) -> (i32, i32) {
    %c0_i32 = arith.constant 0 : i32
    %c0_i32_0 = arith.constant 0 : i32
    %c0_i32_1 = arith.constant 0 : i32
    return %c0_i32, %c0_i32_0 : i32, i32
  }
  func.func @transform_5(%arg0: i32) -> (i32, i32) {
    %c0_i32 = arith.constant 0 : i32
    %c0_i32_0 = arith.constant 0 : i32
    %c0_i32_1 = arith.constant 0 : i32
    return %c0_i32, %c0_i32_0 : i32, i32
  }
  func.func @transform_6(%arg0: i32) -> (i32, i32) {
    %c0_i32 = arith.constant 0 : i32
    %c0_i32_0 = arith.constant 0 : i32
    %c0_i32_1 = arith.constant 0 : i32
    return %c0_i32, %c0_i32_0 : i32, i32
  }
  func.func @transform_7(%arg0: i32) -> (i32, i32) {
    %c0_i32 = arith.constant 0 : i32
    %c0_i32_0 = arith.constant 0 : i32
    %c0_i32_1 = arith.constant 0 : i32
    return %c0_i32, %c0_i32_0 : i32, i32
  }
  func.func @transform_8(%arg0: i32) -> (i32, i32) {
    %c0_i32 = arith.constant 0 : i32
    %c0_i32_0 = arith.constant 0 : i32
    %c0_i32_1 = arith.constant 0 : i32
    return %c0_i32, %c0_i32_0 : i32, i32
  }
  func.func @transform_9(%arg0: i32) -> (i32, i32) {
    %c0_i32 = arith.constant 0 : i32
    %c0_i32_0 = arith.constant 0 : i32
    %c0_i32_1 = arith.constant 0 : i32
    return %c0_i32, %c0_i32_0 : i32, i32
  }
  func.func @transform_10(%arg0: i32) -> (i32, i32) {
    %c0_i32 = arith.constant 0 : i32
    %c0_i32_0 = arith.constant 0 : i32
    %c0_i32_1 = arith.constant 0 : i32
    return %c0_i32, %c0_i32_0 : i32, i32
  }
  func.func @transform_11(%arg0: i32) -> (i32, i32) {
    %c0_i32 = arith.constant 0 : i32
    %c0_i32_0 = arith.constant 0 : i32
    %c0_i32_1 = arith.constant 0 : i32
    return %c0_i32, %c0_i32_0 : i32, i32
  }
  func.func @transform_12(%arg0: i32) -> (i32, i32) {
    %c0_i32 = arith.constant 0 : i32
    %c0_i32_0 = arith.constant 0 : i32
    %c0_i32_1 = arith.constant 0 : i32
    return %c0_i32, %c0_i32_0 : i32, i32
  }
  func.func @transform_13(%arg0: i32) -> (i32, i32) {
    %c0_i32 = arith.constant 0 : i32
    %c0_i32_0 = arith.constant 0 : i32
    %c0_i32_1 = arith.constant 0 : i32
    return %c0_i32, %c0_i32_0 : i32, i32
  }
  func.func @transform_14(%arg0: i32) -> (i32, i32) {
    %c0_i32 = arith.constant 0 : i32
    %c0_i32_0 = arith.constant 0 : i32
    %c0_i32_1 = arith.constant 0 : i32
    return %c0_i32, %c0_i32_0 : i32, i32
  }
  func.func @transform_15(%arg0: i32) -> (i32, i32) {
    %c0_i32 = arith.constant 0 : i32
    %c0_i32_0 = arith.constant 0 : i32
    %c0_i32_1 = arith.constant 0 : i32
    return %c0_i32, %c0_i32_0 : i32, i32
  }
  func.func @transform_16(%arg0: i32) -> (i32, i32) {
    %c0_i32 = arith.constant 0 : i32
    %c0_i32_0 = arith.constant 0 : i32
    return %arg0, %c0_i32 : i32, i32
  }
}

</mosaic_0001>

<llo_original>
// kernel: net_forward.1
$region0: #{net_forward.1}
  #allocation0 [shape = 'u32[]', space=smem, size = 0x4, offset = 0x4, fixed_abs, tag = 'smem constant byte address 0x4 - core index']
  #allocation1 [shape = 'u32[144,128]{1,0:T(1,128)}', space=vmem, size = 0x12000, scoped, tag = 'internal scratch']
  %s0 = inlined_call_operand.vmem [shape: bf16[8,512], index: 0, kind: input, shape index: {}]
  %s1 = inlined_call_operand.vmem [shape: bf16[8,128], index: 1, kind: input, shape index: {}]
  %s2 = inlined_call_operand.hbm [shape: bf16[512,512], index: 2, kind: input, shape index: {}]
  %s3 = inlined_call_operand.vmem [shape: f32[1,512], index: 3, kind: input, shape index: {}]
  %s4 = inlined_call_operand.hbm [shape: bf16[128,512], index: 4, kind: input, shape index: {}]
  %s5 = inlined_call_operand.vmem [shape: f32[1,512], index: 5, kind: input, shape index: {}]
  %s6 = inlined_call_operand.hbm [shape: bf16[512,256], index: 6, kind: input, shape index: {}]
  %s7 = inlined_call_operand.vmem [shape: f32[1,256], index: 7, kind: input, shape index: {}]
  %s8 = inlined_call_operand.hbm [shape: bf16[256,256], index: 8, kind: input, shape index: {}]
  %s9 = inlined_call_operand.vmem [shape: f32[1,256], index: 9, kind: input, shape index: {}]
  %s10 = inlined_call_operand.hbm [shape: bf16[768,128], index: 10, kind: input, shape index: {}]
  %s11 = inlined_call_operand.vmem [shape: f32[1,128], index: 11, kind: input, shape index: {}]
  %s12 = inlined_call_operand.vmem [shape: bf16[128,128], index: 12, kind: input, shape index: {}]
  %s13 = inlined_call_operand.vmem [shape: f32[1,128], index: 13, kind: input, shape index: {}]
  %s14 = inlined_call_operand.vmem [shape: bf16[128,128], index: 14, kind: input, shape index: {}]
  %s15 = inlined_call_operand.vmem [shape: f32[1,128], index: 15, kind: input, shape index: {}]
  %s16 = inlined_call_operand.vmem [shape: f32[8,128], index: 16, kind: output, shape index: {}]
  %s17 = sld [smem:[#allocation0]]
  $region94: #{net_forward.1} parent=0
    _
  %s19 = ssub.s32 1, %s17
  %s20 = scalar_select 0, %s19, %s17
  $region1: #{net_forward.1} parent=0
    #allocation2 [shape = 'u8[524288]{0}', space=vmem, size = 0x80000, scoped, tag = 'input window, operand 2, single buffered']
    #allocation3 [shape = 's32[1]{0}', space=sflag, size = 0x4, scoped, tag = 'scoped memory for net_forward.1']
    #allocation4 [shape = 'u8[131072]{0}', space=vmem, size = 0x20000, scoped, tag = 'input window, operand 4, single buffered']
    #allocation5 [shape = 's32[1]{0}', space=sflag, size = 0x4, scoped, tag = 'scoped memory for net_forward.1']
    #allocation6 [shape = 'u8[262144]{0}', space=vmem, size = 0x40000, scoped, tag = 'input window, operand 6, single buffered']
    #allocation7 [shape = 'u8[131072]{0}', space=vmem, size = 0x20000, scoped, tag = 'input window, operand 8, single buffered']
    #allocation8 [shape = 's32[1]{0}', space=sflag, size = 0x4, scoped, tag = 'scoped memory for net_forward.1']
    #allocation9 [shape = 'u8[196608]{0}', space=vmem, size = 0x30000, scoped, tag = 'input window, operand 10, single buffered']
    %21 = vsyncpa [#allocation3], 0
    %22 = vsyncpa [#allocation5], 0
    %23 = vsyncpa [#allocation8], 0
    // Predicated region
    $region2: #{net_forward.1} parent=1 // pred_check
      _
    $region3: #{net_forward.1} parent=1 // pred_check_branch
      %25 = sbr.rel (0) target = $region5
    $region4: #{net_forward.1} parent=1 // pred_region
      _
    $region5: #{net_forward.1} parent=1 // pred_fallthru
      _
    // Predicated region
    $region6: #{net_forward.1} parent=1 // pred_check
      _
    $region7: #{net_forward.1} parent=1 // pred_check_branch
      %27 = sbr.rel (0) target = $region9
    $region8: #{net_forward.1} parent=1 // pred_region
      _
    $region9: #{net_forward.1} parent=1 // pred_fallthru
      _
    // Predicated region
    $region10: #{net_forward.1} parent=1 // pred_check
      _
    $region11: #{net_forward.1} parent=1 // pred_check_branch
      %29 = sbr.rel (0) target = $region13
    $region12: #{net_forward.1} parent=1 // pred_region
      %s31 = ssub.s32 16384, 16384
      %32 = vsyncadd [#allocation3], %s31
      %s33 = sshll.u32 [#allocation2], 4
      %s34 = int_to_ptr.vmem [resolvable:$true] %s33
      %39 = dma.hbm_to_vmem [thread:$0]  %s2, 16384, %s34, [#allocation3], 256, 256, 16
    $region13: #{net_forward.1} parent=1 // pred_fallthru
      _
    // Predicated region
    $region14: #{net_forward.1} parent=1 // pred_check
      _
    $region15: #{net_forward.1} parent=1 // pred_check_branch
      %41 = sbr.rel (0) target = $region17
    $region16: #{net_forward.1} parent=1 // pred_region
      _
    $region17: #{net_forward.1} parent=1 // pred_fallthru
      _
    // Predicated region
    $region18: #{net_forward.1} parent=1 // pred_check
      _
    $region19: #{net_forward.1} parent=1 // pred_check_branch
      %43 = sbr.rel (0) target = $region21
    $region20: #{net_forward.1} parent=1 // pred_region
      %s45 = ssub.s32 4096, 4096
      %46 = vsyncadd [#allocation5], %s45
      %s47 = sshll.u32 [#allocation4], 4
      %s48 = int_to_ptr.vmem [resolvable:$true] %s47
      %53 = dma.hbm_to_vmem [thread:$0]  %s4, 4096, %s48, [#allocation5], 256, 256, 16
    $region21: #{net_forward.1} parent=1 // pred_fallthru
      _
    // Predicated region
    $region22: #{net_forward.1} parent=1 // pred_check
      _
    $region23: #{net_forward.1} parent=1 // pred_check_branch
      %55 = sbr.rel (0) target = $region25
    $region24: #{net_forward.1} parent=1 // pred_region
      _
    $region25: #{net_forward.1} parent=1 // pred_fallthru
      _
    // Predicated region
    $region26: #{net_forward.1} parent=1 // pred_check
      _
    $region27: #{net_forward.1} parent=1 // pred_check_branch
      %57 = sbr.rel (0) target = $region29
    $region28: #{net_forward.1} parent=1 // pred_region
      %s59 = ssub.s32 8192, 8192
      %60 = vsyncadd [#allocation5], %s59
      %s61 = sshll.u32 [#allocation6], 4
      %s62 = int_to_ptr.vmem [resolvable:$true] %s61
      %67 = dma.hbm_to_vmem [thread:$0]  %s6, 8192, %s62, [#allocation5], 128, 128, 8
    $region29: #{net_forward.1} parent=1 // pred_fallthru
      _
    // Predicated region
    $region30: #{net_forward.1} parent=1 // pred_check
      _
    $region31: #{net_forward.1} parent=1 // pred_check_branch
      %69 = sbr.rel (0) target = $region33
    $region32: #{net_forward.1} parent=1 // pred_region
      _
    $region33: #{net_forward.1} parent=1 // pred_fallthru
      _
    // Predicated region
    $region34: #{net_forward.1} parent=1 // pred_check
      _
    $region35: #{net_forward.1} parent=1 // pred_check_branch
      %71 = sbr.rel (0) target = $region37
    $region36: #{net_forward.1} parent=1 // pred_region
      %s73 = ssub.s32 4096, 4096
      %74 = vsyncadd [#allocation8], %s73
      %s75 = sshll.u32 [#allocation7], 4
      %s76 = int_to_ptr.vmem [resolvable:$true] %s75
      %81 = dma.hbm_to_vmem [thread:$0]  %s8, 4096, %s76, [#allocation8], 128, 128, 8
    $region37: #{net_forward.1} parent=1 // pred_fallthru
      _
    // Predicated region
    $region38: #{net_forward.1} parent=1 // pred_check
      _
    $region39: #{net_forward.1} parent=1 // pred_check_branch
      %83 = sbr.rel (0) target = $region41
    $region40: #{net_forward.1} parent=1 // pred_region
      _
    $region41: #{net_forward.1} parent=1 // pred_fallthru
      _
    // Predicated region
    $region42: #{net_forward.1} parent=1 // pred_check
      _
    $region43: #{net_forward.1} parent=1 // pred_check_branch
      %85 = sbr.rel (0) target = $region45
    $region44: #{net_forward.1} parent=1 // pred_region
      %s87 = ssub.s32 6144, 6144
      %88 = vsyncadd [#allocation8], %s87
      %s89 = sshll.u32 [#allocation9], 4
      %s90 = int_to_ptr.vmem [resolvable:$true] %s89
      %95 = dma.hbm_to_vmem [thread:$0]  %s10, 6144, %s90, [#allocation8], 64, 64, 4
    $region45: #{net_forward.1} parent=1 // pred_fallthru
      _
    // Predicated region
    $region46: #{net_forward.1} parent=1 // pred_check
      _
    $region47: #{net_forward.1} parent=1 // pred_check_branch
      %97 = sbr.rel (0) target = $region49
    $region48: #{net_forward.1} parent=1 // pred_region
      _
    $region49: #{net_forward.1} parent=1 // pred_fallthru
      _
    // Predicated region
    $region50: #{net_forward.1} parent=1 // pred_check
      _
    $region51: #{net_forward.1} parent=1 // pred_check_branch
      %99 = sbr.rel (0) target = $region53
    $region52: #{net_forward.1} parent=1 // pred_region
      _
    $region53: #{net_forward.1} parent=1 // pred_fallthru
      _
    // Predicated region
    $region54: #{net_forward.1} parent=1 // pred_check
      _
    $region55: #{net_forward.1} parent=1 // pred_check_branch
      %101 = sbr.rel (0) target = $region57
    $region56: #{net_forward.1} parent=1 // pred_region
      _
    $region57: #{net_forward.1} parent=1 // pred_fallthru
      _
    // Predicated region
    $region58: #{net_forward.1} parent=1 // pred_check
      _
    $region59: #{net_forward.1} parent=1 // pred_check_branch
      %103 = sbr.rel (0) target = $region61
    $region60: #{net_forward.1} parent=1 // pred_region
      _
    $region61: #{net_forward.1} parent=1 // pred_fallthru
      _
    // Predicated region
    $region62: #{net_forward.1} parent=1 // pred_check
      _
    $region63: #{net_forward.1} parent=1 // pred_check_branch
      %105 = sbr.rel (0) target = $region65
    $region64: #{net_forward.1} parent=1 // pred_region
      _
    $region65: #{net_forward.1} parent=1 // pred_fallthru
      _
    // Predicated region
    $region66: #{net_forward.1} parent=1 // pred_check
      _
    $region67: #{net_forward.1} parent=1 // pred_check_branch
      %107 = sbr.rel (0) target = $region69
    $region68: #{net_forward.1} parent=1 // pred_region
      %108 = dma.done [#allocation3], 16384
    $region69: #{net_forward.1} parent=1 // pred_fallthru
      _
    // Predicated region
    $region70: #{net_forward.1} parent=1 // pred_check
      _
    $region71: #{net_forward.1} parent=1 // pred_check_branch
      %110 = sbr.rel (0) target = $region73
    $region72: #{net_forward.1} parent=1 // pred_region
      %111 = dma.done [#allocation5], 4096
    $region73: #{net_forward.1} parent=1 // pred_fallthru
      _
    // Predicated region
    $region74: #{net_forward.1} parent=1 // pred_check
      _
    $region75: #{net_forward.1} parent=1 // pred_check_branch
      %113 = sbr.rel (0) target = $region77
    $region76: #{net_forward.1} parent=1 // pred_region
      %114 = dma.done [#allocation5], 8192
    $region77: #{net_forward.1} parent=1 // pred_fallthru
      _
    // Predicated region
    $region78: #{net_forward.1} parent=1 // pred_check
      _
    $region79: #{net_forward.1} parent=1 // pred_check_branch
      %116 = sbr.rel (0) target = $region81
    $region80: #{net_forward.1} parent=1 // pred_region
      %117 = dma.done [#allocation8], 4096
    $region81: #{net_forward.1} parent=1 // pred_fallthru
      _
    // Predicated region
    $region82: #{net_forward.1} parent=1 // pred_check
      _
    $region83: #{net_forward.1} parent=1 // pred_check_branch
      %119 = sbr.rel (0) target = $region85
    $region84: #{net_forward.1} parent=1 // pred_region
      %120 = dma.done [#allocation8], 6144
    $region85: #{net_forward.1} parent=1 // pred_fallthru
      _
    %v122 = vld [vmem:[%s0] sm:$0xff]
    %v123 = vld [vmem:[%s0 + $0x8] sm:$0xff]
    %v124 = vld [vmem:[#allocation2] sm:$0xff]
    %v125 = vld [vmem:[#allocation2 + $0x8] sm:$0xff]
    %v126 = vld [vmem:[#allocation2 + $0x10] sm:$0xff]
    %v127 = vld [vmem:[#allocation2 + $0x18] sm:$0xff]
    %v128 = vld [vmem:[#allocation2 + $0x20] sm:$0xff]
    %v129 = vld [vmem:[#allocation2 + $0x28] sm:$0xff]
    %v130 = vld [vmem:[#allocation2 + $0x30] sm:$0xff]
    %v131 = vld [vmem:[#allocation2 + $0x38] sm:$0xff]
    %v132 = vld [vmem:[#allocation2 + $0x40] sm:$0xff]
    %v133 = vld [vmem:[#allocation2 + $0x48] sm:$0xff]
    %v134 = vld [vmem:[#allocation2 + $0x50] sm:$0xff]
    %v135 = vld [vmem:[#allocation2 + $0x58] sm:$0xff]
    %v136 = vld [vmem:[#allocation2 + $0x60] sm:$0xff]
    %v137 = vld [vmem:[#allocation2 + $0x68] sm:$0xff]
    %v138 = vld [vmem:[#allocation2 + $0x70] sm:$0xff]
    %v139 = vld [vmem:[#allocation2 + $0x78] sm:$0xff]
    %v140 = vld [vmem:[#allocation2 + $0x80] sm:$0xff]
    %v141 = vld [vmem:[#allocation2 + $0x88] sm:$0xff]
    %v142 = vld [vmem:[#allocation2 + $0x90] sm:$0xff]
    %v143 = vld [vmem:[#allocation2 + $0x98] sm:$0xff]
    %v144 = vld [vmem:[#allocation2 + $0xa0] sm:$0xff]
    %v145 = vld [vmem:[#allocation2 + $0xa8] sm:$0xff]
    %v146 = vld [vmem:[#allocation2 + $0xb0] sm:$0xff]
    %v147 = vld [vmem:[#allocation2 + $0xb8] sm:$0xff]
    %v148 = vld [vmem:[#allocation2 + $0xc0] sm:$0xff]
    %v149 = vld [vmem:[#allocation2 + $0xc8] sm:$0xff]
    %v150 = vld [vmem:[#allocation2 + $0xd0] sm:$0xff]
    %v151 = vld [vmem:[#allocation2 + $0xd8] sm:$0xff]
    %v152 = vld [vmem:[#allocation2 + $0xe0] sm:$0xff]
    %v153 = vld [vmem:[#allocation2 + $0xe8] sm:$0xff]
    %v154 = vld [vmem:[#allocation2 + $0xf0] sm:$0xff]
    %v155 = vld [vmem:[#allocation2 + $0xf8] sm:$0xff]
    %v156 = vld [vmem:[#allocation2 + $0x100] sm:$0xff]
    %v157 = vld [vmem:[#allocation2 + $0x108] sm:$0xff]
    %v158 = vld [vmem:[#allocation2 + $0x110] sm:$0xff]
    %v159 = vld [vmem:[#allocation2 + $0x118] sm:$0xff]
    %v160 = vld [vmem:[#allocation2 + $0x120] sm:$0xff]
    %v161 = vld [vmem:[#allocation2 + $0x128] sm:$0xff]
    %v162 = vld [vmem:[#allocation2 + $0x130] sm:$0xff]
    %v163 = vld [vmem:[#allocation2 + $0x138] sm:$0xff]
    %v164 = vld [vmem:[#allocation2 + $0x140] sm:$0xff]
    %v165 = vld [vmem:[#allocation2 + $0x148] sm:$0xff]
    %v166 = vld [vmem:[#allocation2 + $0x150] sm:$0xff]
    %v167 = vld [vmem:[#allocation2 + $0x158] sm:$0xff]
    %v168 = vld [vmem:[#allocation2 + $0x160] sm:$0xff]
    %v169 = vld [vmem:[#allocation2 + $0x168] sm:$0xff]
    %v170 = vld [vmem:[#allocation2 + $0x170] sm:$0xff]
    %v171 = vld [vmem:[#allocation2 + $0x178] sm:$0xff]
    %v172 = vld [vmem:[#allocation2 + $0x180] sm:$0xff]
    %v173 = vld [vmem:[#allocation2 + $0x188] sm:$0xff]
    %v174 = vld [vmem:[#allocation2 + $0x190] sm:$0xff]
    %v175 = vld [vmem:[#allocation2 + $0x198] sm:$0xff]
    %v176 = vld [vmem:[#allocation2 + $0x1a0] sm:$0xff]
    %v177 = vld [vmem:[#allocation2 + $0x1a8] sm:$0xff]
    %v178 = vld [vmem:[#allocation2 + $0x1b0] sm:$0xff]
    %v179 = vld [vmem:[#allocation2 + $0x1b8] sm:$0xff]
    %v180 = vld [vmem:[#allocation2 + $0x1c0] sm:$0xff]
    %v181 = vld [vmem:[#allocation2 + $0x1c8] sm:$0xff]
    %v182 = vld [vmem:[#allocation2 + $0x1d0] sm:$0xff]
    %v183 = vld [vmem:[#allocation2 + $0x1d8] sm:$0xff]
    %v184 = vld [vmem:[#allocation2 + $0x1e0] sm:$0xff]
    %v185 = vld [vmem:[#allocation2 + $0x1e8] sm:$0xff]
    %v186 = vld [vmem:[#allocation2 + $0x1f0] sm:$0xff]
    %v187 = vld [vmem:[#allocation2 + $0x1f8] sm:$0xff]
    %v188 = vld [vmem:[#allocation2 + $0x200] sm:$0xff]
    %v189 = vld [vmem:[#allocation2 + $0x208] sm:$0xff]
    %v190 = vld [vmem:[#allocation2 + $0x210] sm:$0xff]
    %v191 = vld [vmem:[#allocation2 + $0x218] sm:$0xff]
    %v192 = vld [vmem:[#allocation2 + $0x220] sm:$0xff]
    %v193 = vld [vmem:[#allocation2 + $0x228] sm:$0xff]
    %v194 = vld [vmem:[#allocation2 + $0x230] sm:$0xff]
    %v195 = vld [vmem:[#allocation2 + $0x238] sm:$0xff]
    %v196 = vld [vmem:[#allocation2 + $0x240] sm:$0xff]
    %v197 = vld [vmem:[#allocation2 + $0x248] sm:$0xff]
    %v198 = vld [vmem:[#allocation2 + $0x250] sm:$0xff]
    %v199 = vld [vmem:[#allocation2 + $0x258] sm:$0xff]
    %v200 = vld [vmem:[#allocation2 + $0x260] sm:$0xff]
    %v201 = vld [vmem:[#allocation2 + $0x268] sm:$0xff]
    %v202 = vld [vmem:[#allocation2 + $0x270] sm:$0xff]
    %v203 = vld [vmem:[#allocation2 + $0x278] sm:$0xff]
    %v204 = vld [vmem:[#allocation2 + $0x280] sm:$0xff]
    %v205 = vld [vmem:[#allocation2 + $0x288] sm:$0xff]
    %v206 = vld [vmem:[#allocation2 + $0x290] sm:$0xff]
    %v207 = vld [vmem:[#allocation2 + $0x298] sm:$0xff]
    %v208 = vld [vmem:[#allocation2 + $0x2a0] sm:$0xff]
    %v209 = vld [vmem:[#allocation2 + $0x2a8] sm:$0xff]
    %v210 = vld [vmem:[#allocation2 + $0x2b0] sm:$0xff]
    %v211 = vld [vmem:[#allocation2 + $0x2b8] sm:$0xff]
    %v212 = vld [vmem:[#allocation2 + $0x2c0] sm:$0xff]
    %v213 = vld [vmem:[#allocation2 + $0x2c8] sm:$0xff]
    %v214 = vld [vmem:[#allocation2 + $0x2d0] sm:$0xff]
    %v215 = vld [vmem:[#allocation2 + $0x2d8] sm:$0xff]
    %v216 = vld [vmem:[#allocation2 + $0x2e0] sm:$0xff]
    %v217 = vld [vmem:[#allocation2 + $0x2e8] sm:$0xff]
    %v218 = vld [vmem:[#allocation2 + $0x2f0] sm:$0xff]
    %v219 = vld [vmem:[#allocation2 + $0x2f8] sm:$0xff]
    %v220 = vld [vmem:[#allocation2 + $0x300] sm:$0xff]
    %v221 = vld [vmem:[#allocation2 + $0x308] sm:$0xff]
    %v222 = vld [vmem:[#allocation2 + $0x310] sm:$0xff]
    %v223 = vld [vmem:[#allocation2 + $0x318] sm:$0xff]
    %v224 = vld [vmem:[#allocation2 + $0x320] sm:$0xff]
    %v225 = vld [vmem:[#allocation2 + $0x328] sm:$0xff]
    %v226 = vld [vmem:[#allocation2 + $0x330] sm:$0xff]
    %v227 = vld [vmem:[#allocation2 + $0x338] sm:$0xff]
    %v228 = vld [vmem:[#allocation2 + $0x340] sm:$0xff]
    %v229 = vld [vmem:[#allocation2 + $0x348] sm:$0xff]
    %v230 = vld [vmem:[#allocation2 + $0x350] sm:$0xff]
    %v231 = vld [vmem:[#allocation2 + $0x358] sm:$0xff]
    %v232 = vld [vmem:[#allocation2 + $0x360] sm:$0xff]
    %v233 = vld [vmem:[#allocation2 + $0x368] sm:$0xff]
    %v234 = vld [vmem:[#allocation2 + $0x370] sm:$0xff]
    %v235 = vld [vmem:[#allocation2 + $0x378] sm:$0xff]
    %v236 = vld [vmem:[#allocation2 + $0x380] sm:$0xff]
    %v237 = vld [vmem:[#allocation2 + $0x388] sm:$0xff]
    %v238 = vld [vmem:[#allocation2 + $0x390] sm:$0xff]
    %v239 = vld [vmem:[#allocation2 + $0x398] sm:$0xff]
    %v240 = vld [vmem:[#allocation2 + $0x3a0] sm:$0xff]
    %v241 = vld [vmem:[#allocation2 + $0x3a8] sm:$0xff]
    %v242 = vld [vmem:[#allocation2 + $0x3b0] sm:$0xff]
    %v243 = vld [vmem:[#allocation2 + $0x3b8] sm:$0xff]
    %v244 = vld [vmem:[#allocation2 + $0x3c0] sm:$0xff]
    %v245 = vld [vmem:[#allocation2 + $0x3c8] sm:$0xff]
    %v246 = vld [vmem:[#allocation2 + $0x3d0] sm:$0xff]
    %v247 = vld [vmem:[#allocation2 + $0x3d8] sm:$0xff]
    %v248 = vld [vmem:[#allocation2 + $0x3e0] sm:$0xff]
    %v249 = vld [vmem:[#allocation2 + $0x3e8] sm:$0xff]
    %v250 = vld [vmem:[#allocation2 + $0x3f0] sm:$0xff]
    %v251 = vld [vmem:[#allocation2 + $0x3f8] sm:$0xff]
    %v252 = vld [vmem:[%s3] sm:$0xf]
    %v254 = vlaneseq
    %v255 = vshrl.u32 %v254, 7
    %v256 = vsub.s32 0, %v255
    %v257 = vrot.slane %v252, %v256
    %v258 = vlaneseq
    %v259 = vshrl.u32 %v258, 7
    %v260 = vsub.s32 1, %v259
    %v261 = vrot.slane %v252, %v260
    %v262 = vlaneseq
    %v263 = vshrl.u32 %v262, 7
    %v264 = vsub.s32 2, %v263
    %v265 = vrot.slane %v252, %v264
    %v266 = vlaneseq
    %v267 = vshrl.u32 %v266, 7
    %v268 = vsub.s32 3, %v267
    %v269 = vrot.slane %v252, %v268
    %v276 = vunpack.c.l.b16 %v122
    %v277 = vunpack.c.h.b16 %v122
    %v278 = vunpack.c.l.b16 %v123
    %v279 = vunpack.c.h.b16 %v123
    %v280 = vpack.c.b16 %v276, %v276
    %v281 = vpack.c.b16 %v277, %v277
    %v282 = vpack.c.b16 %v278, %v278
    %v283 = vpack.c.b16 %v279, %v279
    %v416 = vunpack.c.l.b16 %v124
    %v417 = vunpack.c.h.b16 %v124
    %v418 = vunpack.c.l.b16 %v125
    %v419 = vunpack.c.h.b16 %v125
    %v420 = vunpack.c.l.b16 %v126
    %v421 = vunpack.c.h.b16 %v126
    %v422 = vunpack.c.l.b16 %v127
    %v423 = vunpack.c.h.b16 %v127
    %v424 = vunpack.c.l.b16 %v128
    %v425 = vunpack.c.h.b16 %v128
    %v426 = vunpack.c.l.b16 %v129
    %v427 = vunpack.c.h.b16 %v129
    %v428 = vunpack.c.l.b16 %v130
    %v429 = vunpack.c.h.b16 %v130
    %v430 = vunpack.c.l.b16 %v131
    %v431 = vunpack.c.h.b16 %v131
    %v432 = vunpack.c.l.b16 %v132
    %v433 = vunpack.c.h.b16 %v132
    %v434 = vunpack.c.l.b16 %v133
    %v435 = vunpack.c.h.b16 %v133
    %v436 = vunpack.c.l.b16 %v134
    %v437 = vunpack.c.h.b16 %v134
    %v438 = vunpack.c.l.b16 %v135
    %v439 = vunpack.c.h.b16 %v135
    %v440 = vunpack.c.l.b16 %v136
    %v441 = vunpack.c.h.b16 %v136
    %v442 = vunpack.c.l.b16 %v137
    %v443 = vunpack.c.h.b16 %v137
    %v444 = vunpack.c.l.b16 %v138
    %v445 = vunpack.c.h.b16 %v138
    %v446 = vunpack.c.l.b16 %v139
    %v447 = vunpack.c.h.b16 %v139
    %v448 = vunpack.c.l.b16 %v140
    %v449 = vunpack.c.h.b16 %v140
    %v450 = vunpack.c.l.b16 %v141
    %v451 = vunpack.c.h.b16 %v141
    %v452 = vunpack.c.l.b16 %v142
    %v453 = vunpack.c.h.b16 %v142
    %v454 = vunpack.c.l.b16 %v143
    %v455 = vunpack.c.h.b16 %v143
    %v456 = vunpack.c.l.b16 %v144
    %v457 = vunpack.c.h.b16 %v144
    %v458 = vunpack.c.l.b16 %v145
    %v459 = vunpack.c.h.b16 %v145
    %v460 = vunpack.c.l.b16 %v146
    %v461 = vunpack.c.h.b16 %v146
    %v462 = vunpack.c.l.b16 %v147
    %v463 = vunpack.c.h.b16 %v147
    %v464 = vunpack.c.l.b16 %v148
    %v465 = vunpack.c.h.b16 %v148
    %v466 = vunpack.c.l.b16 %v149
    %v467 = vunpack.c.h.b16 %v149
    %v468 = vunpack.c.l.b16 %v150
    %v469 = vunpack.c.h.b16 %v150
    %v470 = vunpack.c.l.b16 %v151
    %v471 = vunpack.c.h.b16 %v151
    %v472 = vunpack.c.l.b16 %v152
    %v473 = vunpack.c.h.b16 %v152
    %v474 = vunpack.c.l.b16 %v153
    %v475 = vunpack.c.h.b16 %v153
    %v476 = vunpack.c.l.b16 %v154
    %v477 = vunpack.c.h.b16 %v154
    %v478 = vunpack.c.l.b16 %v155
    %v479 = vunpack.c.h.b16 %v155
    %v480 = vunpack.c.l.b16 %v156
    %v481 = vunpack.c.h.b16 %v156
    %v482 = vunpack.c.l.b16 %v157
    %v483 = vunpack.c.h.b16 %v157
    %v484 = vunpack.c.l.b16 %v158
    %v485 = vunpack.c.h.b16 %v158
    %v486 = vunpack.c.l.b16 %v159
    %v487 = vunpack.c.h.b16 %v159
    %v488 = vunpack.c.l.b16 %v160
    %v489 = vunpack.c.h.b16 %v160
    %v490 = vunpack.c.l.b16 %v161
    %v491 = vunpack.c.h.b16 %v161
    %v492 = vunpack.c.l.b16 %v162
    %v493 = vunpack.c.h.b16 %v162
    %v494 = vunpack.c.l.b16 %v163
    %v495 = vunpack.c.h.b16 %v163
    %v496 = vunpack.c.l.b16 %v164
    %v497 = vunpack.c.h.b16 %v164
    %v498 = vunpack.c.l.b16 %v165
    %v499 = vunpack.c.h.b16 %v165
    %v500 = vunpack.c.l.b16 %v166
    %v501 = vunpack.c.h.b16 %v166
    %v502 = vunpack.c.l.b16 %v167
    %v503 = vunpack.c.h.b16 %v167
    %v504 = vunpack.c.l.b16 %v168
    %v505 = vunpack.c.h.b16 %v168
    %v506 = vunpack.c.l.b16 %v169
    %v507 = vunpack.c.h.b16 %v169
    %v508 = vunpack.c.l.b16 %v170
    %v509 = vunpack.c.h.b16 %v170
    %v510 = vunpack.c.l.b16 %v171
    %v511 = vunpack.c.h.b16 %v171
    %v512 = vunpack.c.l.b16 %v172
    %v513 = vunpack.c.h.b16 %v172
    %v514 = vunpack.c.l.b16 %v173
    %v515 = vunpack.c.h.b16 %v173
    %v516 = vunpack.c.l.b16 %v174
    %v517 = vunpack.c.h.b16 %v174
    %v518 = vunpack.c.l.b16 %v175
    %v519 = vunpack.c.h.b16 %v175
    %v520 = vunpack.c.l.b16 %v176
    %v521 = vunpack.c.h.b16 %v176
    %v522 = vunpack.c.l.b16 %v177
    %v523 = vunpack.c.h.b16 %v177
    %v524 = vunpack.c.l.b16 %v178
    %v525 = vunpack.c.h.b16 %v178
    %v526 = vunpack.c.l.b16 %v179
    %v527 = vunpack.c.h.b16 %v179
    %v528 = vunpack.c.l.b16 %v180
    %v529 = vunpack.c.h.b16 %v180
    %v530 = vunpack.c.l.b16 %v181
    %v531 = vunpack.c.h.b16 %v181
    %v532 = vunpack.c.l.b16 %v182
    %v533 = vunpack.c.h.b16 %v182
    %v534 = vunpack.c.l.b16 %v183
    %v535 = vunpack.c.h.b16 %v183
    %v536 = vunpack.c.l.b16 %v184
    %v537 = vunpack.c.h.b16 %v184
    %v538 = vunpack.c.l.b16 %v185
    %v539 = vunpack.c.h.b16 %v185
    %v540 = vunpack.c.l.b16 %v186
    %v541 = vunpack.c.h.b16 %v186
    %v542 = vunpack.c.l.b16 %v187
    %v543 = vunpack.c.h.b16 %v187
    %v544 = vunpack.c.l.b16 %v188
    %v545 = vunpack.c.h.b16 %v188
    %v546 = vunpack.c.l.b16 %v189
    %v547 = vunpack.c.h.b16 %v189
    %v548 = vunpack.c.l.b16 %v190
    %v549 = vunpack.c.h.b16 %v190
    %v550 = vunpack.c.l.b16 %v191
    %v551 = vunpack.c.h.b16 %v191
    %v552 = vunpack.c.l.b16 %v192
    %v553 = vunpack.c.h.b16 %v192
    %v554 = vunpack.c.l.b16 %v193
    %v555 = vunpack.c.h.b16 %v193
    %v556 = vunpack.c.l.b16 %v194
    %v557 = vunpack.c.h.b16 %v194
    %v558 = vunpack.c.l.b16 %v195
    %v559 = vunpack.c.h.b16 %v195
    %v560 = vunpack.c.l.b16 %v196
    %v561 = vunpack.c.h.b16 %v196
    %v562 = vunpack.c.l.b16 %v197
    %v563 = vunpack.c.h.b16 %v197
    %v564 = vunpack.c.l.b16 %v198
    %v565 = vunpack.c.h.b16 %v198
    %v566 = vunpack.c.l.b16 %v199
    %v567 = vunpack.c.h.b16 %v199
    %v568 = vunpack.c.l.b16 %v200
    %v569 = vunpack.c.h.b16 %v200
    %v570 = vunpack.c.l.b16 %v201
    %v571 = vunpack.c.h.b16 %v201
    %v572 = vunpack.c.l.b16 %v202
    %v573 = vunpack.c.h.b16 %v202
    %v574 = vunpack.c.l.b16 %v203
    %v575 = vunpack.c.h.b16 %v203
    %v576 = vunpack.c.l.b16 %v204
    %v577 = vunpack.c.h.b16 %v204
    %v578 = vunpack.c.l.b16 %v205
    %v579 = vunpack.c.h.b16 %v205
    %v580 = vunpack.c.l.b16 %v206
    %v581 = vunpack.c.h.b16 %v206
    %v582 = vunpack.c.l.b16 %v207
    %v583 = vunpack.c.h.b16 %v207
    %v584 = vunpack.c.l.b16 %v208
    %v585 = vunpack.c.h.b16 %v208
    %v586 = vunpack.c.l.b16 %v209
    %v587 = vunpack.c.h.b16 %v209
    %v588 = vunpack.c.l.b16 %v210
    %v589 = vunpack.c.h.b16 %v210
    %v590 = vunpack.c.l.b16 %v211
    %v591 = vunpack.c.h.b16 %v211
    %v592 = vunpack.c.l.b16 %v212
    %v593 = vunpack.c.h.b16 %v212
    %v594 = vunpack.c.l.b16 %v213
    %v595 = vunpack.c.h.b16 %v213
    %v596 = vunpack.c.l.b16 %v214
    %v597 = vunpack.c.h.b16 %v214
    %v598 = vunpack.c.l.b16 %v215
    %v599 = vunpack.c.h.b16 %v215
    %v600 = vunpack.c.l.b16 %v216
    %v601 = vunpack.c.h.b16 %v216
    %v602 = vunpack.c.l.b16 %v217
    %v603 = vunpack.c.h.b16 %v217
    %v604 = vunpack.c.l.b16 %v218
    %v605 = vunpack.c.h.b16 %v218
    %v606 = vunpack.c.l.b16 %v219
    %v607 = vunpack.c.h.b16 %v219
    %v608 = vunpack.c.l.b16 %v220
    %v609 = vunpack.c.h.b16 %v220
    %v610 = vunpack.c.l.b16 %v221
    %v611 = vunpack.c.h.b16 %v221
    %v612 = vunpack.c.l.b16 %v222
    %v613 = vunpack.c.h.b16 %v222
    %v614 = vunpack.c.l.b16 %v223
    %v615 = vunpack.c.h.b16 %v223
    %v616 = vunpack.c.l.b16 %v224
    %v617 = vunpack.c.h.b16 %v224
    %v618 = vunpack.c.l.b16 %v225
    %v619 = vunpack.c.h.b16 %v225
    %v620 = vunpack.c.l.b16 %v226
    %v621 = vunpack.c.h.b16 %v226
    %v622 = vunpack.c.l.b16 %v227
    %v623 = vunpack.c.h.b16 %v227
    %v624 = vunpack.c.l.b16 %v228
    %v625 = vunpack.c.h.b16 %v228
    %v626 = vunpack.c.l.b16 %v229
    %v627 = vunpack.c.h.b16 %v229
    %v628 = vunpack.c.l.b16 %v230
    %v629 = vunpack.c.h.b16 %v230
    %v630 = vunpack.c.l.b16 %v231
    %v631 = vunpack.c.h.b16 %v231
    %v632 = vunpack.c.l.b16 %v232
    %v633 = vunpack.c.h.b16 %v232
    %v634 = vunpack.c.l.b16 %v233
    %v635 = vunpack.c.h.b16 %v233
    %v636 = vunpack.c.l.b16 %v234
    %v637 = vunpack.c.h.b16 %v234
    %v638 = vunpack.c.l.b16 %v235
    %v639 = vunpack.c.h.b16 %v235
    %v640 = vunpack.c.l.b16 %v236
    %v641 = vunpack.c.h.b16 %v236
    %v642 = vunpack.c.l.b16 %v237
    %v643 = vunpack.c.h.b16 %v237
    %v644 = vunpack.c.l.b16 %v238
    %v645 = vunpack.c.h.b16 %v238
    %v646 = vunpack.c.l.b16 %v239
    %v647 = vunpack.c.h.b16 %v239
    %v648 = vunpack.c.l.b16 %v240
    %v649 = vunpack.c.h.b16 %v240
    %v650 = vunpack.c.l.b16 %v241
    %v651 = vunpack.c.h.b16 %v241
    %v652 = vunpack.c.l.b16 %v242
    %v653 = vunpack.c.h.b16 %v242
    %v654 = vunpack.c.l.b16 %v243
    %v655 = vunpack.c.h.b16 %v243
    %v656 = vunpack.c.l.b16 %v244
    %v657 = vunpack.c.h.b16 %v244
    %v658 = vunpack.c.l.b16 %v245
    %v659 = vunpack.c.h.b16 %v245
    %v660 = vunpack.c.l.b16 %v246
    %v661 = vunpack.c.h.b16 %v246
    %v662 = vunpack.c.l.b16 %v247
    %v663 = vunpack.c.h.b16 %v247
    %v664 = vunpack.c.l.b16 %v248
    %v665 = vunpack.c.h.b16 %v248
    %v666 = vunpack.c.l.b16 %v249
    %v667 = vunpack.c.h.b16 %v249
    %v668 = vunpack.c.l.b16 %v250
    %v669 = vunpack.c.h.b16 %v250
    %v670 = vunpack.c.l.b16 %v251
    %v671 = vunpack.c.h.b16 %v251
    %v672 = vpack.c.b16 %v420, %v416
    %v673 = vpack.c.b16 %v421, %v417
    %v674 = vpack.c.b16 %v422, %v418
    %v675 = vpack.c.b16 %v423, %v419
    %v676 = vpack.c.b16 %v428, %v424
    %v677 = vpack.c.b16 %v429, %v425
    %v678 = vpack.c.b16 %v430, %v426
    %v679 = vpack.c.b16 %v431, %v427
    %v680 = vpack.c.b16 %v436, %v432
    %v681 = vpack.c.b16 %v437, %v433
    %v682 = vpack.c.b16 %v438, %v434
    %v683 = vpack.c.b16 %v439, %v435
    %v684 = vpack.c.b16 %v444, %v440
    %v685 = vpack.c.b16 %v445, %v441
    %v686 = vpack.c.b16 %v446, %v442
    %v687 = vpack.c.b16 %v447, %v443
    %v688 = vpack.c.b16 %v452, %v448
    %v689 = vpack.c.b16 %v453, %v449
    %v690 = vpack.c.b16 %v454, %v450
    %v691 = vpack.c.b16 %v455, %v451
    %v692 = vpack.c.b16 %v460, %v456
    %v693 = vpack.c.b16 %v461, %v457
    %v694 = vpack.c.b16 %v462, %v458
    %v695 = vpack.c.b16 %v463, %v459
    %v696 = vpack.c.b16 %v468, %v464
    %v697 = vpack.c.b16 %v469, %v465
    %v698 = vpack.c.b16 %v470, %v466
    %v699 = vpack.c.b16 %v471, %v467
    %v700 = vpack.c.b16 %v476, %v472
    %v701 = vpack.c.b16 %v477, %v473
    %v702 = vpack.c.b16 %v478, %v474
    %v703 = vpack.c.b16 %v479, %v475
    %v704 = vpack.c.b16 %v484, %v480
    %v705 = vpack.c.b16 %v485, %v481
    %v706 = vpack.c.b16 %v486, %v482
    %v707 = vpack.c.b16 %v487, %v483
    %v708 = vpack.c.b16 %v492, %v488
    %v709 = vpack.c.b16 %v493, %v489
    %v710 = vpack.c.b16 %v494, %v490
    %v711 = vpack.c.b16 %v495, %v491
    %v712 = vpack.c.b16 %v500, %v496
    %v713 = vpack.c.b16 %v501, %v497
    %v714 = vpack.c.b16 %v502, %v498
    %v715 = vpack.c.b16 %v503, %v499
    %v716 = vpack.c.b16 %v508, %v504
    %v717 = vpack.c.b16 %v509, %v505
    %v718 = vpack.c.b16 %v510, %v506
    %v719 = vpack.c.b16 %v511, %v507
    %v720 = vpack.c.b16 %v516, %v512
    %v721 = vpack.c.b16 %v517, %v513
    %v722 = vpack.c.b16 %v518, %v514
    %v723 = vpack.c.b16 %v519, %v515
    %v724 = vpack.c.b16 %v524, %v520
    %v725 = vpack.c.b16 %v525, %v521
    %v726 = vpack.c.b16 %v526, %v522
    %v727 = vpack.c.b16 %v527, %v523
    %v728 = vpack.c.b16 %v532, %v528
    %v729 = vpack.c.b16 %v533, %v529
    %v730 = vpack.c.b16 %v534, %v530
    %v731 = vpack.c.b16 %v535, %v531
    %v732 = vpack.c.b16 %v540, %v536
    %v733 = vpack.c.b16 %v541, %v537
    %v734 = vpack.c.b16 %v542, %v538
    %v735 = vpack.c.b16 %v543, %v539
    %v736 = vpack.c.b16 %v548, %v544
    %v737 = vpack.c.b16 %v549, %v545
    %v738 = vpack.c.b16 %v550, %v546
    %v739 = vpack.c.b16 %v551, %v547
    %v740 = vpack.c.b16 %v556, %v552
    %v741 = vpack.c.b16 %v557, %v553
    %v742 = vpack.c.b16 %v558, %v554
    %v743 = vpack.c.b16 %v559, %v555
    %v744 = vpack.c.b16 %v564, %v560
    %v745 = vpack.c.b16 %v565, %v561
    %v746 = vpack.c.b16 %v566, %v562
    %v747 = vpack.c.b16 %v567, %v563
    %v748 = vpack.c.b16 %v572, %v568
    %v749 = vpack.c.b16 %v573, %v569
    %v750 = vpack.c.b16 %v574, %v570
    %v751 = vpack.c.b16 %v575, %v571
    %v752 = vpack.c.b16 %v580, %v576
    %v753 = vpack.c.b16 %v581, %v577
    %v754 = vpack.c.b16 %v582, %v578
    %v755 = vpack.c.b16 %v583, %v579
    %v756 = vpack.c.b16 %v588, %v584
    %v757 = vpack.c.b16 %v589, %v585
    %v758 = vpack.c.b16 %v590, %v586
    %v759 = vpack.c.b16 %v591, %v587
    %v760 = vpack.c.b16 %v596, %v592
    %v761 = vpack.c.b16 %v597, %v593
    %v762 = vpack.c.b16 %v598, %v594
    %v763 = vpack.c.b16 %v599, %v595
    %v764 = vpack.c.b16 %v604, %v600
    %v765 = vpack.c.b16 %v605, %v601
    %v766 = vpack.c.b16 %v606, %v602
    %v767 = vpack.c.b16 %v607, %v603
    %v768 = vpack.c.b16 %v612, %v608
    %v769 = vpack.c.b16 %v613, %v609
    %v770 = vpack.c.b16 %v614, %v610
    %v771 = vpack.c.b16 %v615, %v611
    %v772 = vpack.c.b16 %v620, %v616
    %v773 = vpack.c.b16 %v621, %v617
    %v774 = vpack.c.b16 %v622, %v618
    %v775 = vpack.c.b16 %v623, %v619
    %v776 = vpack.c.b16 %v628, %v624
    %v777 = vpack.c.b16 %v629, %v625
    %v778 = vpack.c.b16 %v630, %v626
    %v779 = vpack.c.b16 %v631, %v627
    %v780 = vpack.c.b16 %v636, %v632
    %v781 = vpack.c.b16 %v637, %v633
    %v782 = vpack.c.b16 %v638, %v634
    %v783 = vpack.c.b16 %v639, %v635
    %v784 = vpack.c.b16 %v644, %v640
    %v785 = vpack.c.b16 %v645, %v641
    %v786 = vpack.c.b16 %v646, %v642
    %v787 = vpack.c.b16 %v647, %v643
    %v788 = vpack.c.b16 %v652, %v648
    %v789 = vpack.c.b16 %v653, %v649
    %v790 = vpack.c.b16 %v654, %v650
    %v791 = vpack.c.b16 %v655, %v651
    %v792 = vpack.c.b16 %v660, %v656
    %v793 = vpack.c.b16 %v661, %v657
    %v794 = vpack.c.b16 %v662, %v658
    %v795 = vpack.c.b16 %v663, %v659
    %v796 = vpack.c.b16 %v668, %v664
    %v797 = vpack.c.b16 %v669, %v665
    %v798 = vpack.c.b16 %v670, %v666
    %v799 = vpack.c.b16 %v671, %v667
    %928 = vmatprep.subr.bf16.mxu0 %v673
    %929 = vmatpush1.bf16.msra.mxu0 %v672
    %930 = vmatprep.subr.bf16.mxu0 %v677
    %931 = vmatpush1.bf16.msra.mxu0 %v676
    %932 = vmatprep.subr.bf16.mxu0 %v681
    %933 = vmatpush1.bf16.msra.mxu0 %v680
    %934 = vmatprep.subr.bf16.mxu0 %v685
    %935 = vmatpush1.bf16.msra.mxu0 %v684
    %936 = vmatprep.subr.bf16.mxu0 %v689
    %937 = vmatpush1.bf16.msra.mxu0 %v688
    %938 = vmatprep.subr.bf16.mxu0 %v693
    %939 = vmatpush1.bf16.msra.mxu0 %v692
    %940 = vmatprep.subr.bf16.mxu0 %v697
    %941 = vmatpush1.bf16.msra.mxu0 %v696
    %942 = vmatprep.subr.bf16.mxu0 %v701
    %943 = vmatpush1.bf16.msra.mxu0 %v700
    %944 = vmatprep.subr.bf16.mxu0 %v705
    %945 = vmatpush1.bf16.msra.mxu0 %v704
    %946 = vmatprep.subr.bf16.mxu0 %v709
    %947 = vmatpush1.bf16.msra.mxu0 %v708
    %948 = vmatprep.subr.bf16.mxu0 %v713
    %949 = vmatpush1.bf16.msra.mxu0 %v712
    %950 = vmatprep.subr.bf16.mxu0 %v717
    %951 = vmatpush1.bf16.msra.mxu0 %v716
    %952 = vmatprep.subr.bf16.mxu0 %v721
    %953 = vmatpush1.bf16.msra.mxu0 %v720
    %954 = vmatprep.subr.bf16.mxu0 %v725
    %955 = vmatpush1.bf16.msra.mxu0 %v724
    %956 = vmatprep.subr.bf16.mxu0 %v729
    %957 = vmatpush1.bf16.msra.mxu0 %v728
    %958 = vmatprep.subr.bf16.mxu0 %v733
    %959 = vmatpush1.bf16.msra.mxu0 %v732
    %960 = vmatprep.mubr.bf16.mxu0 %v281
    %961 = vmatmul.mubr.bf16.gmra.mrb[0].mxu0 %v280
    %v962 = vpop.f32.mrb[0].mxu0
    %v963 = vadd.f32 %v257, %v962
    %v964 = vpop.f32.mrb[0].mxu0
    %v965 = vadd.f32 %v261, %v964
    %v966 = vpop.f32.mrb[0].mxu0
    %v967 = vpop.f32.mrb[0].mxu0
    %968 = vdwg.mxu0
    %969 = vmatprep.subr.bf16.mxu0 %v737
    %970 = vmatpush1.bf16.msra.mxu0 %v736
    %971 = vmatprep.subr.bf16.mxu0 %v741
    %972 = vmatpush1.bf16.msra.mxu0 %v740
    %973 = vmatprep.subr.bf16.mxu0 %v745
    %974 = vmatpush1.bf16.msra.mxu0 %v744
    %975 = vmatprep.subr.bf16.mxu0 %v749
    %976 = vmatpush1.bf16.msra.mxu0 %v748
    %977 = vmatprep.subr.bf16.mxu0 %v753
    %978 = vmatpush1.bf16.msra.mxu0 %v752
    %979 = vmatprep.subr.bf16.mxu0 %v757
    %980 = vmatpush1.bf16.msra.mxu0 %v756
    %981 = vmatprep.subr.bf16.mxu0 %v761
    %982 = vmatpush1.bf16.msra.mxu0 %v760
    %983 = vmatprep.subr.bf16.mxu0 %v765
    %984 = vmatpush1.bf16.msra.mxu0 %v764
    %985 = vmatprep.subr.bf16.mxu0 %v769
    %986 = vmatpush1.bf16.msra.mxu0 %v768
    %987 = vmatprep.subr.bf16.mxu0 %v773
    %988 = vmatpush1.bf16.msra.mxu0 %v772
    %989 = vmatprep.subr.bf16.mxu0 %v777
    %990 = vmatpush1.bf16.msra.mxu0 %v776
    %991 = vmatprep.subr.bf16.mxu0 %v781
    %992 = vmatpush1.bf16.msra.mxu0 %v780
    %993 = vmatprep.subr.bf16.mxu0 %v785
    %994 = vmatpush1.bf16.msra.mxu0 %v784
    %995 = vmatprep.subr.bf16.mxu0 %v789
    %996 = vmatpush1.bf16.msra.mxu0 %v788
    %997 = vmatprep.subr.bf16.mxu0 %v793
    %998 = vmatpush1.bf16.msra.mxu0 %v792
    %999 = vmatprep.subr.bf16.mxu0 %v797
    %1000 = vmatpush1.bf16.msra.mxu0 %v796
    %1001 = vmatprep.mubr.bf16.mxu0 %v283
    %1002 = vmatmul.mubr.bf16.gmra.mrb[0].mxu0 %v282
    %v1003 = vpop.f32.mrb[0].mxu0
    %v1004 = vadd.f32 %v963, %v1003
    %v1005 = vpop.f32.mrb[0].mxu0
    %v1006 = vadd.f32 %v965, %v1005
    %v1007 = vpop.f32.mrb[0].mxu0
    %v1008 = vpop.f32.mrb[0].mxu0
    %1009 = vdwg.mxu0
    %1010 = vmatprep.subr.bf16.mxu0 %v675
    %1011 = vmatpush1.bf16.msra.mxu0 %v674
    %1012 = vmatprep.subr.bf16.mxu0 %v679
    %1013 = vmatpush1.bf16.msra.mxu0 %v678
    %1014 = vmatprep.subr.bf16.mxu0 %v683
    %1015 = vmatpush1.bf16.msra.mxu0 %v682
    %1016 = vmatprep.subr.bf16.mxu0 %v687
    %1017 = vmatpush1.bf16.msra.mxu0 %v686
    %1018 = vmatprep.subr.bf16.mxu0 %v691
    %1019 = vmatpush1.bf16.msra.mxu0 %v690
    %1020 = vmatprep.subr.bf16.mxu0 %v695
    %1021 = vmatpush1.bf16.msra.mxu0 %v694
    %1022 = vmatprep.subr.bf16.mxu0 %v699
    %1023 = vmatpush1.bf16.msra.mxu0 %v698
    %1024 = vmatprep.subr.bf16.mxu0 %v703
    %1025 = vmatpush1.bf16.msra.mxu0 %v702
    %1026 = vmatprep.subr.bf16.mxu0 %v707
    %1027 = vmatpush1.bf16.msra.mxu0 %v706
    %1028 = vmatprep.subr.bf16.mxu0 %v711
    %1029 = vmatpush1.bf16.msra.mxu0 %v710
    %1030 = vmatprep.subr.bf16.mxu0 %v715
    %1031 = vmatpush1.bf16.msra.mxu0 %v714
    %1032 = vmatprep.subr.bf16.mxu0 %v719
    %1033 = vmatpush1.bf16.msra.mxu0 %v718
    %1034 = vmatprep.subr.bf16.mxu0 %v723
    %1035 = vmatpush1.bf16.msra.mxu0 %v722
    %1036 = vmatprep.subr.bf16.mxu0 %v727
    %1037 = vmatpush1.bf16.msra.mxu0 %v726
    %1038 = vmatprep.subr.bf16.mxu0 %v731
    %1039 = vmatpush1.bf16.msra.mxu0 %v730
    %1040 = vmatprep.subr.bf16.mxu0 %v735
    %1041 = vmatpush1.bf16.msra.mxu0 %v734
    %1042 = vmatprep.mubr.bf16.mxu0 %v281
    %1043 = vmatmul.mubr.bf16.gmra.mrb[0].mxu0 %v280
    %v1044 = vpop.f32.mrb[0].mxu0
    %v1045 = vadd.f32 %v265, %v1044
    %v1046 = vpop.f32.mrb[0].mxu0
    %v1047 = vadd.f32 %v269, %v1046
    %v1048 = vpop.f32.mrb[0].mxu0
    %v1049 = vpop.f32.mrb[0].mxu0
    %1050 = vdwg.mxu0
    %1051 = vmatprep.subr.bf16.mxu0 %v739
    %1052 = vmatpush1.bf16.msra.mxu0 %v738
    %1053 = vmatprep.subr.bf16.mxu0 %v743
    %1054 = vmatpush1.bf16.msra.mxu0 %v742
    %1055 = vmatprep.subr.bf16.mxu0 %v747
    %1056 = vmatpush1.bf16.msra.mxu0 %v746
    %1057 = vmatprep.subr.bf16.mxu0 %v751
    %1058 = vmatpush1.bf16.msra.mxu0 %v750
    %1059 = vmatprep.subr.bf16.mxu0 %v755
    %1060 = vmatpush1.bf16.msra.mxu0 %v754
    %1061 = vmatprep.subr.bf16.mxu0 %v759
    %1062 = vmatpush1.bf16.msra.mxu0 %v758
    %1063 = vmatprep.subr.bf16.mxu0 %v763
    %1064 = vmatpush1.bf16.msra.mxu0 %v762
    %1065 = vmatprep.subr.bf16.mxu0 %v767
    %1066 = vmatpush1.bf16.msra.mxu0 %v766
    %1067 = vmatprep.subr.bf16.mxu0 %v771
    %1068 = vmatpush1.bf16.msra.mxu0 %v770
    %1069 = vmatprep.subr.bf16.mxu0 %v775
    %1070 = vmatpush1.bf16.msra.mxu0 %v774
    %1071 = vmatprep.subr.bf16.mxu0 %v779
    %1072 = vmatpush1.bf16.msra.mxu0 %v778
    %1073 = vmatprep.subr.bf16.mxu0 %v783
    %1074 = vmatpush1.bf16.msra.mxu0 %v782
    %1075 = vmatprep.subr.bf16.mxu0 %v787
    %1076 = vmatpush1.bf16.msra.mxu0 %v786
    %1077 = vmatprep.subr.bf16.mxu0 %v791
    %1078 = vmatpush1.bf16.msra.mxu0 %v790
    %1079 = vmatprep.subr.bf16.mxu0 %v795
    %1080 = vmatpush1.bf16.msra.mxu0 %v794
    %1081 = vmatprep.subr.bf16.mxu0 %v799
    %1082 = vmatpush1.bf16.msra.mxu0 %v798
    %1083 = vmatprep.mubr.bf16.mxu0 %v283
    %1084 = vmatmul.mubr.bf16.gmra.mrb[0].mxu0 %v282
    %v1085 = vpop.f32.mrb[0].mxu0
    %v1086 = vadd.f32 %v1045, %v1085
    %v1087 = vpop.f32.mrb[0].mxu0
    %v1088 = vadd.f32 %v1047, %v1087
    %v1089 = vpop.f32.mrb[0].mxu0
    %v1090 = vpop.f32.mrb[0].mxu0
    %1091 = vdwg.mxu0
    %v1092 = vld [vmem:[%s1] sm:$0xf]
    %v1093 = vld [vmem:[#allocation4] sm:$0xff]
    %v1094 = vld [vmem:[#allocation4 + $0x8] sm:$0xff]
    %v1095 = vld [vmem:[#allocation4 + $0x10] sm:$0xff]
    %v1096 = vld [vmem:[#allocation4 + $0x18] sm:$0xff]
    %v1097 = vld [vmem:[#allocation4 + $0x20] sm:$0xff]
    %v1098 = vld [vmem:[#allocation4 + $0x28] sm:$0xff]
    %v1099 = vld [vmem:[#allocation4 + $0x30] sm:$0xff]
    %v1100 = vld [vmem:[#allocation4 + $0x38] sm:$0xff]
    %v1101 = vld [vmem:[#allocation4 + $0x40] sm:$0xff]
    %v1102 = vld [vmem:[#allocation4 + $0x48] sm:$0xff]
    %v1103 = vld [vmem:[#allocation4 + $0x50] sm:$0xff]
    %v1104 = vld [vmem:[#allocation4 + $0x58] sm:$0xff]
    %v1105 = vld [vmem:[#allocation4 + $0x60] sm:$0xff]
    %v1106 = vld [vmem:[#allocation4 + $0x68] sm:$0xff]
    %v1107 = vld [vmem:[#allocation4 + $0x70] sm:$0xff]
    %v1108 = vld [vmem:[#allocation4 + $0x78] sm:$0xff]
    %v1109 = vld [vmem:[#allocation4 + $0x80] sm:$0xff]
    %v1110 = vld [vmem:[#allocation4 + $0x88] sm:$0xff]
    %v1111 = vld [vmem:[#allocation4 + $0x90] sm:$0xff]
    %v1112 = vld [vmem:[#allocation4 + $0x98] sm:$0xff]
    %v1113 = vld [vmem:[#allocation4 + $0xa0] sm:$0xff]
    %v1114 = vld [vmem:[#allocation4 + $0xa8] sm:$0xff]
    %v1115 = vld [vmem:[#allocation4 + $0xb0] sm:$0xff]
    %v1116 = vld [vmem:[#allocation4 + $0xb8] sm:$0xff]
    %v1117 = vld [vmem:[#allocation4 + $0xc0] sm:$0xff]
    %v1118 = vld [vmem:[#allocation4 + $0xc8] sm:$0xff]
    %v1119 = vld [vmem:[#allocation4 + $0xd0] sm:$0xff]
    %v1120 = vld [vmem:[#allocation4 + $0xd8] sm:$0xff]
    %v1121 = vld [vmem:[#allocation4 + $0xe0] sm:$0xff]
    %v1122 = vld [vmem:[#allocation4 + $0xe8] sm:$0xff]
    %v1123 = vld [vmem:[#allocation4 + $0xf0] sm:$0xff]
    %v1124 = vld [vmem:[#allocation4 + $0xf8] sm:$0xff]
    %v1125 = vld [vmem:[%s5] sm:$0xf]
    %v1127 = vlaneseq
    %v1128 = vshrl.u32 %v1127, 7
    %v1129 = vsub.s32 0, %v1128
    %v1130 = vrot.slane %v1125, %v1129
    %v1131 = vlaneseq
    %v1132 = vshrl.u32 %v1131, 7
    %v1133 = vsub.s32 1, %v1132
    %v1134 = vrot.slane %v1125, %v1133
    %v1135 = vlaneseq
    %v1136 = vshrl.u32 %v1135, 7
    %v1137 = vsub.s32 2, %v1136
    %v1138 = vrot.slane %v1125, %v1137
    %v1139 = vlaneseq
    %v1140 = vshrl.u32 %v1139, 7
    %v1141 = vsub.s32 3, %v1140
    %v1142 = vrot.slane %v1125, %v1141
    %v1179 = vunpack.c.l.b16 %v1093
    %v1180 = vunpack.c.h.b16 %v1093
    %v1181 = vunpack.c.l.b16 %v1094
    %v1182 = vunpack.c.h.b16 %v1094
    %v1183 = vunpack.c.l.b16 %v1095
    %v1184 = vunpack.c.h.b16 %v1095
    %v1185 = vunpack.c.l.b16 %v1096
    %v1186 = vunpack.c.h.b16 %v1096
    %v1187 = vunpack.c.l.b16 %v1097
    %v1188 = vunpack.c.h.b16 %v1097
    %v1189 = vunpack.c.l.b16 %v1098
    %v1190 = vunpack.c.h.b16 %v1098
    %v1191 = vunpack.c.l.b16 %v1099
    %v1192 = vunpack.c.h.b16 %v1099
    %v1193 = vunpack.c.l.b16 %v1100
    %v1194 = vunpack.c.h.b16 %v1100
    %v1195 = vunpack.c.l.b16 %v1101
    %v1196 = vunpack.c.h.b16 %v1101
    %v1197 = vunpack.c.l.b16 %v1102
    %v1198 = vunpack.c.h.b16 %v1102
    %v1199 = vunpack.c.l.b16 %v1103
    %v1200 = vunpack.c.h.b16 %v1103
    %v1201 = vunpack.c.l.b16 %v1104
    %v1202 = vunpack.c.h.b16 %v1104
    %v1203 = vunpack.c.l.b16 %v1105
    %v1204 = vunpack.c.h.b16 %v1105
    %v1205 = vunpack.c.l.b16 %v1106
    %v1206 = vunpack.c.h.b16 %v1106
    %v1207 = vunpack.c.l.b16 %v1107
    %v1208 = vunpack.c.h.b16 %v1107
    %v1209 = vunpack.c.l.b16 %v1108
    %v1210 = vunpack.c.h.b16 %v1108
    %v1211 = vunpack.c.l.b16 %v1109
    %v1212 = vunpack.c.h.b16 %v1109
    %v1213 = vunpack.c.l.b16 %v1110
    %v1214 = vunpack.c.h.b16 %v1110
    %v1215 = vunpack.c.l.b16 %v1111
    %v1216 = vunpack.c.h.b16 %v1111
    %v1217 = vunpack.c.l.b16 %v1112
    %v1218 = vunpack.c.h.b16 %v1112
    %v1219 = vunpack.c.l.b16 %v1113
    %v1220 = vunpack.c.h.b16 %v1113
    %v1221 = vunpack.c.l.b16 %v1114
    %v1222 = vunpack.c.h.b16 %v1114
    %v1223 = vunpack.c.l.b16 %v1115
    %v1224 = vunpack.c.h.b16 %v1115
    %v1225 = vunpack.c.l.b16 %v1116
    %v1226 = vunpack.c.h.b16 %v1116
    %v1227 = vunpack.c.l.b16 %v1117
    %v1228 = vunpack.c.h.b16 %v1117
    %v1229 = vunpack.c.l.b16 %v1118
    %v1230 = vunpack.c.h.b16 %v1118
    %v1231 = vunpack.c.l.b16 %v1119
    %v1232 = vunpack.c.h.b16 %v1119
    %v1233 = vunpack.c.l.b16 %v1120
    %v1234 = vunpack.c.h.b16 %v1120
    %v1235 = vunpack.c.l.b16 %v1121
    %v1236 = vunpack.c.h.b16 %v1121
    %v1237 = vunpack.c.l.b16 %v1122
    %v1238 = vunpack.c.h.b16 %v1122
    %v1239 = vunpack.c.l.b16 %v1123
    %v1240 = vunpack.c.h.b16 %v1123
    %v1241 = vunpack.c.l.b16 %v1124
    %v1242 = vunpack.c.h.b16 %v1124
    %v1243 = vpack.c.b16 %v1183, %v1179
    %v1244 = vpack.c.b16 %v1184, %v1180
    %v1245 = vpack.c.b16 %v1185, %v1181
    %v1246 = vpack.c.b16 %v1186, %v1182
    %v1247 = vpack.c.b16 %v1191, %v1187
    %v1248 = vpack.c.b16 %v1192, %v1188
    %v1249 = vpack.c.b16 %v1193, %v1189
    %v1250 = vpack.c.b16 %v1194, %v1190
    %v1251 = vpack.c.b16 %v1199, %v1195
    %v1252 = vpack.c.b16 %v1200, %v1196
    %v1253 = vpack.c.b16 %v1201, %v1197
    %v1254 = vpack.c.b16 %v1202, %v1198
    %v1255 = vpack.c.b16 %v1207, %v1203
    %v1256 = vpack.c.b16 %v1208, %v1204
    %v1257 = vpack.c.b16 %v1209, %v1205
    %v1258 = vpack.c.b16 %v1210, %v1206
    %v1259 = vpack.c.b16 %v1215, %v1211
    %v1260 = vpack.c.b16 %v1216, %v1212
    %v1261 = vpack.c.b16 %v1217, %v1213
    %v1262 = vpack.c.b16 %v1218, %v1214
    %v1263 = vpack.c.b16 %v1223, %v1219
    %v1264 = vpack.c.b16 %v1224, %v1220
    %v1265 = vpack.c.b16 %v1225, %v1221
    %v1266 = vpack.c.b16 %v1226, %v1222
    %v1267 = vpack.c.b16 %v1231, %v1227
    %v1268 = vpack.c.b16 %v1232, %v1228
    %v1269 = vpack.c.b16 %v1233, %v1229
    %v1270 = vpack.c.b16 %v1234, %v1230
    %v1271 = vpack.c.b16 %v1239, %v1235
    %v1272 = vpack.c.b16 %v1240, %v1236
    %v1273 = vpack.c.b16 %v1241, %v1237
    %v1274 = vpack.c.b16 %v1242, %v1238
    %1307 = vmatprep.subr.bf16.mxu0 %v1244
    %1308 = vmatpush1.bf16.msra.mxu0 %v1243
    %1309 = vmatprep.subr.bf16.mxu0 %v1248
    %1310 = vmatpush1.bf16.msra.mxu0 %v1247
    %1311 = vmatprep.subr.bf16.mxu0 %v1252
    %1312 = vmatpush1.bf16.msra.mxu0 %v1251
    %1313 = vmatprep.subr.bf16.mxu0 %v1256
    %1314 = vmatpush1.bf16.msra.mxu0 %v1255
    %1315 = vmatprep.subr.bf16.mxu0 %v1260
    %1316 = vmatpush1.bf16.msra.mxu0 %v1259
    %1317 = vmatprep.subr.bf16.mxu0 %v1264
    %1318 = vmatpush1.bf16.msra.mxu0 %v1263
    %1319 = vmatprep.subr.bf16.mxu0 %v1268
    %1320 = vmatpush1.bf16.msra.mxu0 %v1267
    %1321 = vmatprep.subr.bf16.mxu0 %v1272
    %1322 = vmatpush1.bf16.msra.mxu0 %v1271
    %1323 = vmatprep.subr.bf16.mxu0 0
    %1324 = vmatpush1.bf16.msra.mxu0 0
    %1325 = vmatprep.subr.bf16.mxu0 0
    %1326 = vmatpush1.bf16.msra.mxu0 0
    %1327 = vmatprep.subr.bf16.mxu0 0
    %1328 = vmatpush1.bf16.msra.mxu0 0
    %1329 = vmatprep.subr.bf16.mxu0 0
    %1330 = vmatpush1.bf16.msra.mxu0 0
    %1331 = vmatprep.subr.bf16.mxu0 0
    %1332 = vmatpush1.bf16.msra.mxu0 0
    %1333 = vmatprep.subr.bf16.mxu0 0
    %1334 = vmatpush1.bf16.msra.mxu0 0
    %1335 = vmatprep.subr.bf16.mxu0 0
    %1336 = vmatpush1.bf16.msra.mxu0 0
    %1337 = vmatprep.subr.bf16.mxu0 0
    %1338 = vmatpush1.bf16.msra.mxu0 0
    %1339 = vmatprep.mubr.bf16.mxu0 0
    %1340 = vmatmul.mubr.bf16.gmra.mrb[0].mxu0 %v1092
    %v1341 = vpop.f32.mrb[0].mxu0
    %v1342 = vadd.f32 %v1130, %v1341
    %v1343 = vpop.f32.mrb[0].mxu0
    %v1344 = vadd.f32 %v1134, %v1343
    %v1345 = vpop.f32.mrb[0].mxu0
    %v1346 = vpop.f32.mrb[0].mxu0
    %1347 = vdwg.mxu0
    %1348 = vmatprep.subr.bf16.mxu0 %v1246
    %1349 = vmatpush1.bf16.msra.mxu0 %v1245
    %1350 = vmatprep.subr.bf16.mxu0 %v1250
    %1351 = vmatpush1.bf16.msra.mxu0 %v1249
    %1352 = vmatprep.subr.bf16.mxu0 %v1254
    %1353 = vmatpush1.bf16.msra.mxu0 %v1253
    %1354 = vmatprep.subr.bf16.mxu0 %v1258
    %1355 = vmatpush1.bf16.msra.mxu0 %v1257
    %1356 = vmatprep.subr.bf16.mxu0 %v1262
    %1357 = vmatpush1.bf16.msra.mxu0 %v1261
    %1358 = vmatprep.subr.bf16.mxu0 %v1266
    %1359 = vmatpush1.bf16.msra.mxu0 %v1265
    %1360 = vmatprep.subr.bf16.mxu0 %v1270
    %1361 = vmatpush1.bf16.msra.mxu0 %v1269
    %1362 = vmatprep.subr.bf16.mxu0 %v1274
    %1363 = vmatpush1.bf16.msra.mxu0 %v1273
    %1364 = vmatprep.subr.bf16.mxu0 0
    %1365 = vmatpush1.bf16.msra.mxu0 0
    %1366 = vmatprep.subr.bf16.mxu0 0
    %1367 = vmatpush1.bf16.msra.mxu0 0
    %1368 = vmatprep.subr.bf16.mxu0 0
    %1369 = vmatpush1.bf16.msra.mxu0 0
    %1370 = vmatprep.subr.bf16.mxu0 0
    %1371 = vmatpush1.bf16.msra.mxu0 0
    %1372 = vmatprep.subr.bf16.mxu0 0
    %1373 = vmatpush1.bf16.msra.mxu0 0
    %1374 = vmatprep.subr.bf16.mxu0 0
    %1375 = vmatpush1.bf16.msra.mxu0 0
    %1376 = vmatprep.subr.bf16.mxu0 0
    %1377 = vmatpush1.bf16.msra.mxu0 0
    %1378 = vmatprep.subr.bf16.mxu0 0
    %1379 = vmatpush1.bf16.msra.mxu0 0
    %1380 = vmatprep.mubr.bf16.mxu0 0
    %1381 = vmatmul.mubr.bf16.gmra.mrb[0].mxu0 %v1092
    %v1382 = vpop.f32.mrb[0].mxu0
    %v1383 = vadd.f32 %v1138, %v1382
    %v1384 = vpop.f32.mrb[0].mxu0
    %v1385 = vadd.f32 %v1142, %v1384
    %v1386 = vpop.f32.mrb[0].mxu0
    %v1387 = vpop.f32.mrb[0].mxu0
    %1388 = vdwg.mxu0
    %v1389 = vmax.f32 %v1342, 0.0
    %v1390 = vmax.f32 %v1344, 0.0
    %v1391 = vmax.f32 %v1383, 0.0
    %v1392 = vmax.f32 %v1385, 0.0
    %v1393 = vpack.c.bf16 %v1389, %v1389
    %v1394 = vpack.c.bf16 %v1390, %v1390
    %v1395 = vpack.c.bf16 %v1391, %v1391
    %v1396 = vpack.c.bf16 %v1392, %v1392
    %v1397 = vld [vmem:[#allocation6] sm:$0xff]
    %v1398 = vld [vmem:[#allocation6 + $0x8] sm:$0xff]
    %v1399 = vld [vmem:[#allocation6 + $0x10] sm:$0xff]
    %v1400 = vld [vmem:[#allocation6 + $0x18] sm:$0xff]
    %v1401 = vld [vmem:[#allocation6 + $0x20] sm:$0xff]
    %v1402 = vld [vmem:[#allocation6 + $0x28] sm:$0xff]
    %v1403 = vld [vmem:[#allocation6 + $0x30] sm:$0xff]
    %v1404 = vld [vmem:[#allocation6 + $0x38] sm:$0xff]
    %v1405 = vld [vmem:[#allocation6 + $0x40] sm:$0xff]
    %v1406 = vld [vmem:[#allocation6 + $0x48] sm:$0xff]
    %v1407 = vld [vmem:[#allocation6 + $0x50] sm:$0xff]
    %v1408 = vld [vmem:[#allocation6 + $0x58] sm:$0xff]
    %v1409 = vld [vmem:[#allocation6 + $0x60] sm:$0xff]
    %v1410 = vld [vmem:[#allocation6 + $0x68] sm:$0xff]
    %v1411 = vld [vmem:[#allocation6 + $0x70] sm:$0xff]
    %v1412 = vld [vmem:[#allocation6 + $0x78] sm:$0xff]
    %v1413 = vld [vmem:[#allocation6 + $0x80] sm:$0xff]
    %v1414 = vld [vmem:[#allocation6 + $0x88] sm:$0xff]
    %v1415 = vld [vmem:[#allocation6 + $0x90] sm:$0xff]
    %v1416 = vld [vmem:[#allocation6 + $0x98] sm:$0xff]
    %v1417 = vld [vmem:[#allocation6 + $0xa0] sm:$0xff]
    %v1418 = vld [vmem:[#allocation6 + $0xa8] sm:$0xff]
    %v1419 = vld [vmem:[#allocation6 + $0xb0] sm:$0xff]
    %v1420 = vld [vmem:[#allocation6 + $0xb8] sm:$0xff]
    %v1421 = vld [vmem:[#allocation6 + $0xc0] sm:$0xff]
    %v1422 = vld [vmem:[#allocation6 + $0xc8] sm:$0xff]
    %v1423 = vld [vmem:[#allocation6 + $0xd0] sm:$0xff]
    %v1424 = vld [vmem:[#allocation6 + $0xd8] sm:$0xff]
    %v1425 = vld [vmem:[#allocation6 + $0xe0] sm:$0xff]
    %v1426 = vld [vmem:[#allocation6 + $0xe8] sm:$0xff]
    %v1427 = vld [vmem:[#allocation6 + $0xf0] sm:$0xff]
    %v1428 = vld [vmem:[#allocation6 + $0xf8] sm:$0xff]
    %v1429 = vld [vmem:[#allocation6 + $0x100] sm:$0xff]
    %v1430 = vld [vmem:[#allocation6 + $0x108] sm:$0xff]
    %v1431 = vld [vmem:[#allocation6 + $0x110] sm:$0xff]
    %v1432 = vld [vmem:[#allocation6 + $0x118] sm:$0xff]
    %v1433 = vld [vmem:[#allocation6 + $0x120] sm:$0xff]
    %v1434 = vld [vmem:[#allocation6 + $0x128] sm:$0xff]
    %v1435 = vld [vmem:[#allocation6 + $0x130] sm:$0xff]
    %v1436 = vld [vmem:[#allocation6 + $0x138] sm:$0xff]
    %v1437 = vld [vmem:[#allocation6 + $0x140] sm:$0xff]
    %v1438 = vld [vmem:[#allocation6 + $0x148] sm:$0xff]
    %v1439 = vld [vmem:[#allocation6 + $0x150] sm:$0xff]
    %v1440 = vld [vmem:[#allocation6 + $0x158] sm:$0xff]
    %v1441 = vld [vmem:[#allocation6 + $0x160] sm:$0xff]
    %v1442 = vld [vmem:[#allocation6 + $0x168] sm:$0xff]
    %v1443 = vld [vmem:[#allocation6 + $0x170] sm:$0xff]
    %v1444 = vld [vmem:[#allocation6 + $0x178] sm:$0xff]
    %v1445 = vld [vmem:[#allocation6 + $0x180] sm:$0xff]
    %v1446 = vld [vmem:[#allocation6 + $0x188] sm:$0xff]
    %v1447 = vld [vmem:[#allocation6 + $0x190] sm:$0xff]
    %v1448 = vld [vmem:[#allocation6 + $0x198] sm:$0xff]
    %v1449 = vld [vmem:[#allocation6 + $0x1a0] sm:$0xff]
    %v1450 = vld [vmem:[#allocation6 + $0x1a8] sm:$0xff]
    %v1451 = vld [vmem:[#allocation6 + $0x1b0] sm:$0xff]
    %v1452 = vld [vmem:[#allocation6 + $0x1b8] sm:$0xff]
    %v1453 = vld [vmem:[#allocation6 + $0x1c0] sm:$0xff]
    %v1454 = vld [vmem:[#allocation6 + $0x1c8] sm:$0xff]
    %v1455 = vld [vmem:[#allocation6 + $0x1d0] sm:$0xff]
    %v1456 = vld [vmem:[#allocation6 + $0x1d8] sm:$0xff]
    %v1457 = vld [vmem:[#allocation6 + $0x1e0] sm:$0xff]
    %v1458 = vld [vmem:[#allocation6 + $0x1e8] sm:$0xff]
    %v1459 = vld [vmem:[#allocation6 + $0x1f0] sm:$0xff]
    %v1460 = vld [vmem:[#allocation6 + $0x1f8] sm:$0xff]
    %v1461 = vld [vmem:[%s7] sm:$0x3]
    %v1463 = vlaneseq
    %v1464 = vshrl.u32 %v1463, 7
    %v1465 = vsub.s32 0, %v1464
    %v1466 = vrot.slane %v1461, %v1465
    %v1467 = vlaneseq
    %v1468 = vshrl.u32 %v1467, 7
    %v1469 = vsub.s32 1, %v1468
    %v1470 = vrot.slane %v1461, %v1469
    %v1537 = vunpack.c.l.b16 %v1397
    %v1538 = vunpack.c.h.b16 %v1397
    %v1539 = vunpack.c.l.b16 %v1398
    %v1540 = vunpack.c.h.b16 %v1398
    %v1541 = vunpack.c.l.b16 %v1399
    %v1542 = vunpack.c.h.b16 %v1399
    %v1543 = vunpack.c.l.b16 %v1400
    %v1544 = vunpack.c.h.b16 %v1400
    %v1545 = vunpack.c.l.b16 %v1401
    %v1546 = vunpack.c.h.b16 %v1401
    %v1547 = vunpack.c.l.b16 %v1402
    %v1548 = vunpack.c.h.b16 %v1402
    %v1549 = vunpack.c.l.b16 %v1403
    %v1550 = vunpack.c.h.b16 %v1403
    %v1551 = vunpack.c.l.b16 %v1404
    %v1552 = vunpack.c.h.b16 %v1404
    %v1553 = vunpack.c.l.b16 %v1405
    %v1554 = vunpack.c.h.b16 %v1405
    %v1555 = vunpack.c.l.b16 %v1406
    %v1556 = vunpack.c.h.b16 %v1406
    %v1557 = vunpack.c.l.b16 %v1407
    %v1558 = vunpack.c.h.b16 %v1407
    %v1559 = vunpack.c.l.b16 %v1408
    %v1560 = vunpack.c.h.b16 %v1408
    %v1561 = vunpack.c.l.b16 %v1409
    %v1562 = vunpack.c.h.b16 %v1409
    %v1563 = vunpack.c.l.b16 %v1410
    %v1564 = vunpack.c.h.b16 %v1410
    %v1565 = vunpack.c.l.b16 %v1411
    %v1566 = vunpack.c.h.b16 %v1411
    %v1567 = vunpack.c.l.b16 %v1412
    %v1568 = vunpack.c.h.b16 %v1412
    %v1569 = vunpack.c.l.b16 %v1413
    %v1570 = vunpack.c.h.b16 %v1413
    %v1571 = vunpack.c.l.b16 %v1414
    %v1572 = vunpack.c.h.b16 %v1414
    %v1573 = vunpack.c.l.b16 %v1415
    %v1574 = vunpack.c.h.b16 %v1415
    %v1575 = vunpack.c.l.b16 %v1416
    %v1576 = vunpack.c.h.b16 %v1416
    %v1577 = vunpack.c.l.b16 %v1417
    %v1578 = vunpack.c.h.b16 %v1417
    %v1579 = vunpack.c.l.b16 %v1418
    %v1580 = vunpack.c.h.b16 %v1418
    %v1581 = vunpack.c.l.b16 %v1419
    %v1582 = vunpack.c.h.b16 %v1419
    %v1583 = vunpack.c.l.b16 %v1420
    %v1584 = vunpack.c.h.b16 %v1420
    %v1585 = vunpack.c.l.b16 %v1421
    %v1586 = vunpack.c.h.b16 %v1421
    %v1587 = vunpack.c.l.b16 %v1422
    %v1588 = vunpack.c.h.b16 %v1422
    %v1589 = vunpack.c.l.b16 %v1423
    %v1590 = vunpack.c.h.b16 %v1423
    %v1591 = vunpack.c.l.b16 %v1424
    %v1592 = vunpack.c.h.b16 %v1424
    %v1593 = vunpack.c.l.b16 %v1425
    %v1594 = vunpack.c.h.b16 %v1425
    %v1595 = vunpack.c.l.b16 %v1426
    %v1596 = vunpack.c.h.b16 %v1426
    %v1597 = vunpack.c.l.b16 %v1427
    %v1598 = vunpack.c.h.b16 %v1427
    %v1599 = vunpack.c.l.b16 %v1428
    %v1600 = vunpack.c.h.b16 %v1428
    %v1601 = vunpack.c.l.b16 %v1429
    %v1602 = vunpack.c.h.b16 %v1429
    %v1603 = vunpack.c.l.b16 %v1430
    %v1604 = vunpack.c.h.b16 %v1430
    %v1605 = vunpack.c.l.b16 %v1431
    %v1606 = vunpack.c.h.b16 %v1431
    %v1607 = vunpack.c.l.b16 %v1432
    %v1608 = vunpack.c.h.b16 %v1432
    %v1609 = vunpack.c.l.b16 %v1433
    %v1610 = vunpack.c.h.b16 %v1433
    %v1611 = vunpack.c.l.b16 %v1434
    %v1612 = vunpack.c.h.b16 %v1434
    %v1613 = vunpack.c.l.b16 %v1435
    %v1614 = vunpack.c.h.b16 %v1435
    %v1615 = vunpack.c.l.b16 %v1436
    %v1616 = vunpack.c.h.b16 %v1436
    %v1617 = vunpack.c.l.b16 %v1437
    %v1618 = vunpack.c.h.b16 %v1437
    %v1619 = vunpack.c.l.b16 %v1438
    %v1620 = vunpack.c.h.b16 %v1438
    %v1621 = vunpack.c.l.b16 %v1439
    %v1622 = vunpack.c.h.b16 %v1439
    %v1623 = vunpack.c.l.b16 %v1440
    %v1624 = vunpack.c.h.b16 %v1440
    %v1625 = vunpack.c.l.b16 %v1441
    %v1626 = vunpack.c.h.b16 %v1441
    %v1627 = vunpack.c.l.b16 %v1442
    %v1628 = vunpack.c.h.b16 %v1442
    %v1629 = vunpack.c.l.b16 %v1443
    %v1630 = vunpack.c.h.b16 %v1443
    %v1631 = vunpack.c.l.b16 %v1444
    %v1632 = vunpack.c.h.b16 %v1444
    %v1633 = vunpack.c.l.b16 %v1445
    %v1634 = vunpack.c.h.b16 %v1445
    %v1635 = vunpack.c.l.b16 %v1446
    %v1636 = vunpack.c.h.b16 %v1446
    %v1637 = vunpack.c.l.b16 %v1447
    %v1638 = vunpack.c.h.b16 %v1447
    %v1639 = vunpack.c.l.b16 %v1448
    %v1640 = vunpack.c.h.b16 %v1448
    %v1641 = vunpack.c.l.b16 %v1449
    %v1642 = vunpack.c.h.b16 %v1449
    %v1643 = vunpack.c.l.b16 %v1450
    %v1644 = vunpack.c.h.b16 %v1450
    %v1645 = vunpack.c.l.b16 %v1451
    %v1646 = vunpack.c.h.b16 %v1451
    %v1647 = vunpack.c.l.b16 %v1452
    %v1648 = vunpack.c.h.b16 %v1452
    %v1649 = vunpack.c.l.b16 %v1453
    %v1650 = vunpack.c.h.b16 %v1453
    %v1651 = vunpack.c.l.b16 %v1454
    %v1652 = vunpack.c.h.b16 %v1454
    %v1653 = vunpack.c.l.b16 %v1455
    %v1654 = vunpack.c.h.b16 %v1455
    %v1655 = vunpack.c.l.b16 %v1456
    %v1656 = vunpack.c.h.b16 %v1456
    %v1657 = vunpack.c.l.b16 %v1457
    %v1658 = vunpack.c.h.b16 %v1457
    %v1659 = vunpack.c.l.b16 %v1458
    %v1660 = vunpack.c.h.b16 %v1458
    %v1661 = vunpack.c.l.b16 %v1459
    %v1662 = vunpack.c.h.b16 %v1459
    %v1663 = vunpack.c.l.b16 %v1460
    %v1664 = vunpack.c.h.b16 %v1460
    %v1665 = vpack.c.b16 %v1539, %v1537
    %v1666 = vpack.c.b16 %v1540, %v1538
    %v1667 = vpack.c.b16 %v1543, %v1541
    %v1668 = vpack.c.b16 %v1544, %v1542
    %v1669 = vpack.c.b16 %v1547, %v1545
    %v1670 = vpack.c.b16 %v1548, %v1546
    %v1671 = vpack.c.b16 %v1551, %v1549
    %v1672 = vpack.c.b16 %v1552, %v1550
    %v1673 = vpack.c.b16 %v1555, %v1553
    %v1674 = vpack.c.b16 %v1556, %v1554
    %v1675 = vpack.c.b16 %v1559, %v1557
    %v1676 = vpack.c.b16 %v1560, %v1558
    %v1677 = vpack.c.b16 %v1563, %v1561
    %v1678 = vpack.c.b16 %v1564, %v1562
    %v1679 = vpack.c.b16 %v1567, %v1565
    %v1680 = vpack.c.b16 %v1568, %v1566
    %v1681 = vpack.c.b16 %v1571, %v1569
    %v1682 = vpack.c.b16 %v1572, %v1570
    %v1683 = vpack.c.b16 %v1575, %v1573
    %v1684 = vpack.c.b16 %v1576, %v1574
    %v1685 = vpack.c.b16 %v1579, %v1577
    %v1686 = vpack.c.b16 %v1580, %v1578
    %v1687 = vpack.c.b16 %v1583, %v1581
    %v1688 = vpack.c.b16 %v1584, %v1582
    %v1689 = vpack.c.b16 %v1587, %v1585
    %v1690 = vpack.c.b16 %v1588, %v1586
    %v1691 = vpack.c.b16 %v1591, %v1589
    %v1692 = vpack.c.b16 %v1592, %v1590
    %v1693 = vpack.c.b16 %v1595, %v1593
    %v1694 = vpack.c.b16 %v1596, %v1594
    %v1695 = vpack.c.b16 %v1599, %v1597
    %v1696 = vpack.c.b16 %v1600, %v1598
    %v1697 = vpack.c.b16 %v1603, %v1601
    %v1698 = vpack.c.b16 %v1604, %v1602
    %v1699 = vpack.c.b16 %v1607, %v1605
    %v1700 = vpack.c.b16 %v1608, %v1606
    %v1701 = vpack.c.b16 %v1611, %v1609
    %v1702 = vpack.c.b16 %v1612, %v1610
    %v1703 = vpack.c.b16 %v1615, %v1613
    %v1704 = vpack.c.b16 %v1616, %v1614
    %v1705 = vpack.c.b16 %v1619, %v1617
    %v1706 = vpack.c.b16 %v1620, %v1618
    %v1707 = vpack.c.b16 %v1623, %v1621
    %v1708 = vpack.c.b16 %v1624, %v1622
    %v1709 = vpack.c.b16 %v1627, %v1625
    %v1710 = vpack.c.b16 %v1628, %v1626
    %v1711 = vpack.c.b16 %v1631, %v1629
    %v1712 = vpack.c.b16 %v1632, %v1630
    %v1713 = vpack.c.b16 %v1635, %v1633
    %v1714 = vpack.c.b16 %v1636, %v1634
    %v1715 = vpack.c.b16 %v1639, %v1637
    %v1716 = vpack.c.b16 %v1640, %v1638
    %v1717 = vpack.c.b16 %v1643, %v1641
    %v1718 = vpack.c.b16 %v1644, %v1642
    %v1719 = vpack.c.b16 %v1647, %v1645
    %v1720 = vpack.c.b16 %v1648, %v1646
    %v1721 = vpack.c.b16 %v1651, %v1649
    %v1722 = vpack.c.b16 %v1652, %v1650
    %v1723 = vpack.c.b16 %v1655, %v1653
    %v1724 = vpack.c.b16 %v1656, %v1654
    %v1725 = vpack.c.b16 %v1659, %v1657
    %v1726 = vpack.c.b16 %v1660, %v1658
    %v1727 = vpack.c.b16 %v1663, %v1661
    %v1728 = vpack.c.b16 %v1664, %v1662
    %1793 = vmatprep.subr.bf16.mxu0 %v1666
    %1794 = vmatpush1.bf16.msra.mxu0 %v1665
    %1795 = vmatprep.subr.bf16.mxu0 %v1668
    %1796 = vmatpush1.bf16.msra.mxu0 %v1667
    %1797 = vmatprep.subr.bf16.mxu0 %v1670
    %1798 = vmatpush1.bf16.msra.mxu0 %v1669
    %1799 = vmatprep.subr.bf16.mxu0 %v1672
    %1800 = vmatpush1.bf16.msra.mxu0 %v1671
    %1801 = vmatprep.subr.bf16.mxu0 %v1674
    %1802 = vmatpush1.bf16.msra.mxu0 %v1673
    %1803 = vmatprep.subr.bf16.mxu0 %v1676
    %1804 = vmatpush1.bf16.msra.mxu0 %v1675
    %1805 = vmatprep.subr.bf16.mxu0 %v1678
    %1806 = vmatpush1.bf16.msra.mxu0 %v1677
    %1807 = vmatprep.subr.bf16.mxu0 %v1680
    %1808 = vmatpush1.bf16.msra.mxu0 %v1679
    %1809 = vmatprep.subr.bf16.mxu0 %v1682
    %1810 = vmatpush1.bf16.msra.mxu0 %v1681
    %1811 = vmatprep.subr.bf16.mxu0 %v1684
    %1812 = vmatpush1.bf16.msra.mxu0 %v1683
    %1813 = vmatprep.subr.bf16.mxu0 %v1686
    %1814 = vmatpush1.bf16.msra.mxu0 %v1685
    %1815 = vmatprep.subr.bf16.mxu0 %v1688
    %1816 = vmatpush1.bf16.msra.mxu0 %v1687
    %1817 = vmatprep.subr.bf16.mxu0 %v1690
    %1818 = vmatpush1.bf16.msra.mxu0 %v1689
    %1819 = vmatprep.subr.bf16.mxu0 %v1692
    %1820 = vmatpush1.bf16.msra.mxu0 %v1691
    %1821 = vmatprep.subr.bf16.mxu0 %v1694
    %1822 = vmatpush1.bf16.msra.mxu0 %v1693
    %1823 = vmatprep.subr.bf16.mxu0 %v1696
    %1824 = vmatpush1.bf16.msra.mxu0 %v1695
    %1825 = vmatprep.mubr.bf16.mxu0 %v1394
    %1826 = vmatmul.mubr.bf16.gmra.mrb[0].mxu0 %v1393
    %v1827 = vpop.f32.mrb[0].mxu0
    %v1828 = vadd.f32 %v1466, %v1827
    %v1829 = vpop.f32.mrb[0].mxu0
    %v1830 = vadd.f32 %v1470, %v1829
    %v1831 = vpop.f32.mrb[0].mxu0
    %v1832 = vpop.f32.mrb[0].mxu0
    %1833 = vdwg.mxu0
    %1834 = vmatprep.subr.bf16.mxu0 %v1698
    %1835 = vmatpush1.bf16.msra.mxu0 %v1697
    %1836 = vmatprep.subr.bf16.mxu0 %v1700
    %1837 = vmatpush1.bf16.msra.mxu0 %v1699
    %1838 = vmatprep.subr.bf16.mxu0 %v1702
    %1839 = vmatpush1.bf16.msra.mxu0 %v1701
    %1840 = vmatprep.subr.bf16.mxu0 %v1704
    %1841 = vmatpush1.bf16.msra.mxu0 %v1703
    %1842 = vmatprep.subr.bf16.mxu0 %v1706
    %1843 = vmatpush1.bf16.msra.mxu0 %v1705
    %1844 = vmatprep.subr.bf16.mxu0 %v1708
    %1845 = vmatpush1.bf16.msra.mxu0 %v1707
    %1846 = vmatprep.subr.bf16.mxu0 %v1710
    %1847 = vmatpush1.bf16.msra.mxu0 %v1709
    %1848 = vmatprep.subr.bf16.mxu0 %v1712
    %1849 = vmatpush1.bf16.msra.mxu0 %v1711
    %1850 = vmatprep.subr.bf16.mxu0 %v1714
    %1851 = vmatpush1.bf16.msra.mxu0 %v1713
    %1852 = vmatprep.subr.bf16.mxu0 %v1716
    %1853 = vmatpush1.bf16.msra.mxu0 %v1715
    %1854 = vmatprep.subr.bf16.mxu0 %v1718
    %1855 = vmatpush1.bf16.msra.mxu0 %v1717
    %1856 = vmatprep.subr.bf16.mxu0 %v1720
    %1857 = vmatpush1.bf16.msra.mxu0 %v1719
    %1858 = vmatprep.subr.bf16.mxu0 %v1722
    %1859 = vmatpush1.bf16.msra.mxu0 %v1721
    %1860 = vmatprep.subr.bf16.mxu0 %v1724
    %1861 = vmatpush1.bf16.msra.mxu0 %v1723
    %1862 = vmatprep.subr.bf16.mxu0 %v1726
    %1863 = vmatpush1.bf16.msra.mxu0 %v1725
    %1864 = vmatprep.subr.bf16.mxu0 %v1728
    %1865 = vmatpush1.bf16.msra.mxu0 %v1727
    %1866 = vmatprep.mubr.bf16.mxu0 %v1396
    %1867 = vmatmul.mubr.bf16.gmra.mrb[0].mxu0 %v1395
    %v1868 = vpop.f32.mrb[0].mxu0
    %v1869 = vadd.f32 %v1828, %v1868
    %v1870 = vpop.f32.mrb[0].mxu0
    %v1871 = vadd.f32 %v1830, %v1870
    %v1872 = vpop.f32.mrb[0].mxu0
    %v1873 = vpop.f32.mrb[0].mxu0
    %1874 = vdwg.mxu0
    %v1875 = vmax.f32 %v1869, 0.0
    %v1876 = vmax.f32 %v1871, 0.0
    %v1877 = vpack.c.bf16 %v1875, %v1875
    %v1878 = vpack.c.bf16 %v1876, %v1876
    %v1879 = vld [vmem:[#allocation7] sm:$0xff]
    %v1880 = vld [vmem:[#allocation7 + $0x8] sm:$0xff]
    %v1881 = vld [vmem:[#allocation7 + $0x10] sm:$0xff]
    %v1882 = vld [vmem:[#allocation7 + $0x18] sm:$0xff]
    %v1883 = vld [vmem:[#allocation7 + $0x20] sm:$0xff]
    %v1884 = vld [vmem:[#allocation7 + $0x28] sm:$0xff]
    %v1885 = vld [vmem:[#allocation7 + $0x30] sm:$0xff]
    %v1886 = vld [vmem:[#allocation7 + $0x38] sm:$0xff]
    %v1887 = vld [vmem:[#allocation7 + $0x40] sm:$0xff]
    %v1888 = vld [vmem:[#allocation7 + $0x48] sm:$0xff]
    %v1889 = vld [vmem:[#allocation7 + $0x50] sm:$0xff]
    %v1890 = vld [vmem:[#allocation7 + $0x58] sm:$0xff]
    %v1891 = vld [vmem:[#allocation7 + $0x60] sm:$0xff]
    %v1892 = vld [vmem:[#allocation7 + $0x68] sm:$0xff]
    %v1893 = vld [vmem:[#allocation7 + $0x70] sm:$0xff]
    %v1894 = vld [vmem:[#allocation7 + $0x78] sm:$0xff]
    %v1895 = vld [vmem:[#allocation7 + $0x80] sm:$0xff]
    %v1896 = vld [vmem:[#allocation7 + $0x88] sm:$0xff]
    %v1897 = vld [vmem:[#allocation7 + $0x90] sm:$0xff]
    %v1898 = vld [vmem:[#allocation7 + $0x98] sm:$0xff]
    %v1899 = vld [vmem:[#allocation7 + $0xa0] sm:$0xff]
    %v1900 = vld [vmem:[#allocation7 + $0xa8] sm:$0xff]
    %v1901 = vld [vmem:[#allocation7 + $0xb0] sm:$0xff]
    %v1902 = vld [vmem:[#allocation7 + $0xb8] sm:$0xff]
    %v1903 = vld [vmem:[#allocation7 + $0xc0] sm:$0xff]
    %v1904 = vld [vmem:[#allocation7 + $0xc8] sm:$0xff]
    %v1905 = vld [vmem:[#allocation7 + $0xd0] sm:$0xff]
    %v1906 = vld [vmem:[#allocation7 + $0xd8] sm:$0xff]
    %v1907 = vld [vmem:[#allocation7 + $0xe0] sm:$0xff]
    %v1908 = vld [vmem:[#allocation7 + $0xe8] sm:$0xff]
    %v1909 = vld [vmem:[#allocation7 + $0xf0] sm:$0xff]
    %v1910 = vld [vmem:[#allocation7 + $0xf8] sm:$0xff]
    %v1911 = vld [vmem:[%s9] sm:$0x3]
    %v1913 = vlaneseq
    %v1914 = vshrl.u32 %v1913, 7
    %v1915 = vsub.s32 0, %v1914
    %v1916 = vrot.slane %v1911, %v1915
    %v1917 = vlaneseq
    %v1918 = vshrl.u32 %v1917, 7
    %v1919 = vsub.s32 1, %v1918
    %v1920 = vrot.slane %v1911, %v1919
    %v1955 = vunpack.c.l.b16 %v1879
    %v1956 = vunpack.c.h.b16 %v1879
    %v1957 = vunpack.c.l.b16 %v1880
    %v1958 = vunpack.c.h.b16 %v1880
    %v1959 = vunpack.c.l.b16 %v1881
    %v1960 = vunpack.c.h.b16 %v1881
    %v1961 = vunpack.c.l.b16 %v1882
    %v1962 = vunpack.c.h.b16 %v1882
    %v1963 = vunpack.c.l.b16 %v1883
    %v1964 = vunpack.c.h.b16 %v1883
    %v1965 = vunpack.c.l.b16 %v1884
    %v1966 = vunpack.c.h.b16 %v1884
    %v1967 = vunpack.c.l.b16 %v1885
    %v1968 = vunpack.c.h.b16 %v1885
    %v1969 = vunpack.c.l.b16 %v1886
    %v1970 = vunpack.c.h.b16 %v1886
    %v1971 = vunpack.c.l.b16 %v1887
    %v1972 = vunpack.c.h.b16 %v1887
    %v1973 = vunpack.c.l.b16 %v1888
    %v1974 = vunpack.c.h.b16 %v1888
    %v1975 = vunpack.c.l.b16 %v1889
    %v1976 = vunpack.c.h.b16 %v1889
    %v1977 = vunpack.c.l.b16 %v1890
    %v1978 = vunpack.c.h.b16 %v1890
    %v1979 = vunpack.c.l.b16 %v1891
    %v1980 = vunpack.c.h.b16 %v1891
    %v1981 = vunpack.c.l.b16 %v1892
    %v1982 = vunpack.c.h.b16 %v1892
    %v1983 = vunpack.c.l.b16 %v1893
    %v1984 = vunpack.c.h.b16 %v1893
    %v1985 = vunpack.c.l.b16 %v1894
    %v1986 = vunpack.c.h.b16 %v1894
    %v1987 = vunpack.c.l.b16 %v1895
    %v1988 = vunpack.c.h.b16 %v1895
    %v1989 = vunpack.c.l.b16 %v1896
    %v1990 = vunpack.c.h.b16 %v1896
    %v1991 = vunpack.c.l.b16 %v1897
    %v1992 = vunpack.c.h.b16 %v1897
    %v1993 = vunpack.c.l.b16 %v1898
    %v1994 = vunpack.c.h.b16 %v1898
    %v1995 = vunpack.c.l.b16 %v1899
    %v1996 = vunpack.c.h.b16 %v1899
    %v1997 = vunpack.c.l.b16 %v1900
    %v1998 = vunpack.c.h.b16 %v1900
    %v1999 = vunpack.c.l.b16 %v1901
    %v2000 = vunpack.c.h.b16 %v1901
    %v2001 = vunpack.c.l.b16 %v1902
    %v2002 = vunpack.c.h.b16 %v1902
    %v2003 = vunpack.c.l.b16 %v1903
    %v2004 = vunpack.c.h.b16 %v1903
    %v2005 = vunpack.c.l.b16 %v1904
    %v2006 = vunpack.c.h.b16 %v1904
    %v2007 = vunpack.c.l.b16 %v1905
    %v2008 = vunpack.c.h.b16 %v1905
    %v2009 = vunpack.c.l.b16 %v1906
    %v2010 = vunpack.c.h.b16 %v1906
    %v2011 = vunpack.c.l.b16 %v1907
    %v2012 = vunpack.c.h.b16 %v1907
    %v2013 = vunpack.c.l.b16 %v1908
    %v2014 = vunpack.c.h.b16 %v1908
    %v2015 = vunpack.c.l.b16 %v1909
    %v2016 = vunpack.c.h.b16 %v1909
    %v2017 = vunpack.c.l.b16 %v1910
    %v2018 = vunpack.c.h.b16 %v1910
    %v2019 = vpack.c.b16 %v1957, %v1955
    %v2020 = vpack.c.b16 %v1958, %v1956
    %v2021 = vpack.c.b16 %v1961, %v1959
    %v2022 = vpack.c.b16 %v1962, %v1960
    %v2023 = vpack.c.b16 %v1965, %v1963
    %v2024 = vpack.c.b16 %v1966, %v1964
    %v2025 = vpack.c.b16 %v1969, %v1967
    %v2026 = vpack.c.b16 %v1970, %v1968
    %v2027 = vpack.c.b16 %v1973, %v1971
    %v2028 = vpack.c.b16 %v1974, %v1972
    %v2029 = vpack.c.b16 %v1977, %v1975
    %v2030 = vpack.c.b16 %v1978, %v1976
    %v2031 = vpack.c.b16 %v1981, %v1979
    %v2032 = vpack.c.b16 %v1982, %v1980
    %v2033 = vpack.c.b16 %v1985, %v1983
    %v2034 = vpack.c.b16 %v1986, %v1984
    %v2035 = vpack.c.b16 %v1989, %v1987
    %v2036 = vpack.c.b16 %v1990, %v1988
    %v2037 = vpack.c.b16 %v1993, %v1991
    %v2038 = vpack.c.b16 %v1994, %v1992
    %v2039 = vpack.c.b16 %v1997, %v1995
    %v2040 = vpack.c.b16 %v1998, %v1996
    %v2041 = vpack.c.b16 %v2001, %v1999
    %v2042 = vpack.c.b16 %v2002, %v2000
    %v2043 = vpack.c.b16 %v2005, %v2003
    %v2044 = vpack.c.b16 %v2006, %v2004
    %v2045 = vpack.c.b16 %v2009, %v2007
    %v2046 = vpack.c.b16 %v2010, %v2008
    %v2047 = vpack.c.b16 %v2013, %v2011
    %v2048 = vpack.c.b16 %v2014, %v2012
    %v2049 = vpack.c.b16 %v2017, %v2015
    %v2050 = vpack.c.b16 %v2018, %v2016
    %2083 = vmatprep.subr.bf16.mxu0 %v2020
    %2084 = vmatpush1.bf16.msra.mxu0 %v2019
    %2085 = vmatprep.subr.bf16.mxu0 %v2022
    %2086 = vmatpush1.bf16.msra.mxu0 %v2021
    %2087 = vmatprep.subr.bf16.mxu0 %v2024
    %2088 = vmatpush1.bf16.msra.mxu0 %v2023
    %2089 = vmatprep.subr.bf16.mxu0 %v2026
    %2090 = vmatpush1.bf16.msra.mxu0 %v2025
    %2091 = vmatprep.subr.bf16.mxu0 %v2028
    %2092 = vmatpush1.bf16.msra.mxu0 %v2027
    %2093 = vmatprep.subr.bf16.mxu0 %v2030
    %2094 = vmatpush1.bf16.msra.mxu0 %v2029
    %2095 = vmatprep.subr.bf16.mxu0 %v2032
    %2096 = vmatpush1.bf16.msra.mxu0 %v2031
    %2097 = vmatprep.subr.bf16.mxu0 %v2034
    %2098 = vmatpush1.bf16.msra.mxu0 %v2033
    %2099 = vmatprep.subr.bf16.mxu0 %v2036
    %2100 = vmatpush1.bf16.msra.mxu0 %v2035
    %2101 = vmatprep.subr.bf16.mxu0 %v2038
    %2102 = vmatpush1.bf16.msra.mxu0 %v2037
    %2103 = vmatprep.subr.bf16.mxu0 %v2040
    %2104 = vmatpush1.bf16.msra.mxu0 %v2039
    %2105 = vmatprep.subr.bf16.mxu0 %v2042
    %2106 = vmatpush1.bf16.msra.mxu0 %v2041
    %2107 = vmatprep.subr.bf16.mxu0 %v2044
    %2108 = vmatpush1.bf16.msra.mxu0 %v2043
    %2109 = vmatprep.subr.bf16.mxu0 %v2046
    %2110 = vmatpush1.bf16.msra.mxu0 %v2045
    %2111 = vmatprep.subr.bf16.mxu0 %v2048
    %2112 = vmatpush1.bf16.msra.mxu0 %v2047
    %2113 = vmatprep.subr.bf16.mxu0 %v2050
    %2114 = vmatpush1.bf16.msra.mxu0 %v2049
    %2115 = vmatprep.mubr.bf16.mxu0 %v1878
    %2116 = vmatmul.mubr.bf16.gmra.mrb[0].mxu0 %v1877
    %v2117 = vpop.f32.mrb[0].mxu0
    %v2118 = vadd.f32 %v1916, %v2117
    %v2119 = vpop.f32.mrb[0].mxu0
    %v2120 = vadd.f32 %v1920, %v2119
    %v2121 = vpop.f32.mrb[0].mxu0
    %v2122 = vpop.f32.mrb[0].mxu0
    %2123 = vdwg.mxu0
    %v2124 = vmax.f32 %v2118, 0.0
    %v2125 = vmax.f32 %v2120, 0.0
    %v2126 = vpack.c.bf16 %v2124, %v2124
    %v2127 = vpack.c.bf16 %v2125, %v2125
    %v2128 = vpack.c.bf16 %v1004, %v1004
    %v2129 = vpack.c.bf16 %v1006, %v1006
    %v2130 = vpack.c.bf16 %v1086, %v1086
    %v2131 = vpack.c.bf16 %v1088, %v1088
    %v2132 = vld [vmem:[#allocation9] sm:$0xf]
    %v2133 = vld [vmem:[#allocation9 + $0x4] sm:$0xf]
    %v2134 = vld [vmem:[#allocation9 + $0x8] sm:$0xf]
    %v2135 = vld [vmem:[#allocation9 + $0xc] sm:$0xf]
    %v2136 = vld [vmem:[#allocation9 + $0x10] sm:$0xf]
    %v2137 = vld [vmem:[#allocation9 + $0x14] sm:$0xf]
    %v2138 = vld [vmem:[#allocation9 + $0x18] sm:$0xf]
    %v2139 = vld [vmem:[#allocation9 + $0x1c] sm:$0xf]
    %v2140 = vld [vmem:[#allocation9 + $0x20] sm:$0xf]
    %v2141 = vld [vmem:[#allocation9 + $0x24] sm:$0xf]
    %v2142 = vld [vmem:[#allocation9 + $0x28] sm:$0xf]
    %v2143 = vld [vmem:[#allocation9 + $0x2c] sm:$0xf]
    %v2144 = vld [vmem:[#allocation9 + $0x30] sm:$0xf]
    %v2145 = vld [vmem:[#allocation9 + $0x34] sm:$0xf]
    %v2146 = vld [vmem:[#allocation9 + $0x38] sm:$0xf]
    %v2147 = vld [vmem:[#allocation9 + $0x3c] sm:$0xf]
    %v2148 = vld [vmem:[#allocation9 + $0x40] sm:$0xf]
    %v2149 = vld [vmem:[#allocation9 + $0x44] sm:$0xf]
    %v2150 = vld [vmem:[#allocation9 + $0x48] sm:$0xf]
    %v2151 = vld [vmem:[#allocation9 + $0x4c] sm:$0xf]
    %v2152 = vld [vmem:[#allocation9 + $0x50] sm:$0xf]
    %v2153 = vld [vmem:[#allocation9 + $0x54] sm:$0xf]
    %v2154 = vld [vmem:[#allocation9 + $0x58] sm:$0xf]
    %v2155 = vld [vmem:[#allocation9 + $0x5c] sm:$0xf]
    %v2156 = vld [vmem:[#allocation9 + $0x60] sm:$0xf]
    %v2157 = vld [vmem:[#allocation9 + $0x64] sm:$0xf]
    %v2158 = vld [vmem:[#allocation9 + $0x68] sm:$0xf]
    %v2159 = vld [vmem:[#allocation9 + $0x6c] sm:$0xf]
    %v2160 = vld [vmem:[#allocation9 + $0x70] sm:$0xf]
    %v2161 = vld [vmem:[#allocation9 + $0x74] sm:$0xf]
    %v2162 = vld [vmem:[#allocation9 + $0x78] sm:$0xf]
    %v2163 = vld [vmem:[#allocation9 + $0x7c] sm:$0xf]
    %v2164 = vld [vmem:[#allocation9 + $0x80] sm:$0xf]
    %v2165 = vld [vmem:[#allocation9 + $0x84] sm:$0xf]
    %v2166 = vld [vmem:[#allocation9 + $0x88] sm:$0xf]
    %v2167 = vld [vmem:[#allocation9 + $0x8c] sm:$0xf]
    %v2168 = vld [vmem:[#allocation9 + $0x90] sm:$0xf]
    %v2169 = vld [vmem:[#allocation9 + $0x94] sm:$0xf]
    %v2170 = vld [vmem:[#allocation9 + $0x98] sm:$0xf]
    %v2171 = vld [vmem:[#allocation9 + $0x9c] sm:$0xf]
    %v2172 = vld [vmem:[#allocation9 + $0xa0] sm:$0xf]
    %v2173 = vld [vmem:[#allocation9 + $0xa4] sm:$0xf]
    %v2174 = vld [vmem:[#allocation9 + $0xa8] sm:$0xf]
    %v2175 = vld [vmem:[#allocation9 + $0xac] sm:$0xf]
    %v2176 = vld [vmem:[#allocation9 + $0xb0] sm:$0xf]
    %v2177 = vld [vmem:[#allocation9 + $0xb4] sm:$0xf]
    %v2178 = vld [vmem:[#allocation9 + $0xb8] sm:$0xf]
    %v2179 = vld [vmem:[#allocation9 + $0xbc] sm:$0xf]
    %v2180 = vld [vmem:[#allocation9 + $0xc0] sm:$0xf]
    %v2181 = vld [vmem:[#allocation9 + $0xc4] sm:$0xf]
    %v2182 = vld [vmem:[#allocation9 + $0xc8] sm:$0xf]
    %v2183 = vld [vmem:[#allocation9 + $0xcc] sm:$0xf]
    %v2184 = vld [vmem:[#allocation9 + $0xd0] sm:$0xf]
    %v2185 = vld [vmem:[#allocation9 + $0xd4] sm:$0xf]
    %v2186 = vld [vmem:[#allocation9 + $0xd8] sm:$0xf]
    %v2187 = vld [vmem:[#allocation9 + $0xdc] sm:$0xf]
    %v2188 = vld [vmem:[#allocation9 + $0xe0] sm:$0xf]
    %v2189 = vld [vmem:[#allocation9 + $0xe4] sm:$0xf]
    %v2190 = vld [vmem:[#allocation9 + $0xe8] sm:$0xf]
    %v2191 = vld [vmem:[#allocation9 + $0xec] sm:$0xf]
    %v2192 = vld [vmem:[#allocation9 + $0xf0] sm:$0xf]
    %v2193 = vld [vmem:[#allocation9 + $0xf4] sm:$0xf]
    %v2194 = vld [vmem:[#allocation9 + $0xf8] sm:$0xf]
    %v2195 = vld [vmem:[#allocation9 + $0xfc] sm:$0xf]
    %v2196 = vld [vmem:[#allocation9 + $0x100] sm:$0xf]
    %v2197 = vld [vmem:[#allocation9 + $0x104] sm:$0xf]
    %v2198 = vld [vmem:[#allocation9 + $0x108] sm:$0xf]
    %v2199 = vld [vmem:[#allocation9 + $0x10c] sm:$0xf]
    %v2200 = vld [vmem:[#allocation9 + $0x110] sm:$0xf]
    %v2201 = vld [vmem:[#allocation9 + $0x114] sm:$0xf]
    %v2202 = vld [vmem:[#allocation9 + $0x118] sm:$0xf]
    %v2203 = vld [vmem:[#allocation9 + $0x11c] sm:$0xf]
    %v2204 = vld [vmem:[#allocation9 + $0x120] sm:$0xf]
    %v2205 = vld [vmem:[#allocation9 + $0x124] sm:$0xf]
    %v2206 = vld [vmem:[#allocation9 + $0x128] sm:$0xf]
    %v2207 = vld [vmem:[#allocation9 + $0x12c] sm:$0xf]
    %v2208 = vld [vmem:[#allocation9 + $0x130] sm:$0xf]
    %v2209 = vld [vmem:[#allocation9 + $0x134] sm:$0xf]
    %v2210 = vld [vmem:[#allocation9 + $0x138] sm:$0xf]
    %v2211 = vld [vmem:[#allocation9 + $0x13c] sm:$0xf]
    %v2212 = vld [vmem:[#allocation9 + $0x140] sm:$0xf]
    %v2213 = vld [vmem:[#allocation9 + $0x144] sm:$0xf]
    %v2214 = vld [vmem:[#allocation9 + $0x148] sm:$0xf]
    %v2215 = vld [vmem:[#allocation9 + $0x14c] sm:$0xf]
    %v2216 = vld [vmem:[#allocation9 + $0x150] sm:$0xf]
    %v2217 = vld [vmem:[#allocation9 + $0x154] sm:$0xf]
    %v2218 = vld [vmem:[#allocation9 + $0x158] sm:$0xf]
    %v2219 = vld [vmem:[#allocation9 + $0x15c] sm:$0xf]
    %v2220 = vld [vmem:[#allocation9 + $0x160] sm:$0xf]
    %v2221 = vld [vmem:[#allocation9 + $0x164] sm:$0xf]
    %v2222 = vld [vmem:[#allocation9 + $0x168] sm:$0xf]
    %v2223 = vld [vmem:[#allocation9 + $0x16c] sm:$0xf]
    %v2224 = vld [vmem:[#allocation9 + $0x170] sm:$0xf]
    %v2225 = vld [vmem:[#allocation9 + $0x174] sm:$0xf]
    %v2226 = vld [vmem:[#allocation9 + $0x178] sm:$0xf]
    %v2227 = vld [vmem:[#allocation9 + $0x17c] sm:$0xf]
    %v2228 = vld [vmem:[%s11] sm:$0x1]
    %v2230 = vlaneseq
    %v2231 = vshrl.u32 %v2230, 7
    %v2232 = vsub.s32 0, %v2231
    %v2233 = vrot.slane %v2228, %v2232
    %v2331 = vunpack.c.l.b16 %v2132
    %v2332 = vunpack.c.l.b16 %v2133
    %v2333 = vunpack.c.l.b16 %v2134
    %v2334 = vunpack.c.l.b16 %v2135
    %v2335 = vunpack.c.l.b16 %v2136
    %v2336 = vunpack.c.l.b16 %v2137
    %v2337 = vunpack.c.l.b16 %v2138
    %v2338 = vunpack.c.l.b16 %v2139
    %v2339 = vunpack.c.l.b16 %v2140
    %v2340 = vunpack.c.l.b16 %v2141
    %v2341 = vunpack.c.l.b16 %v2142
    %v2342 = vunpack.c.l.b16 %v2143
    %v2343 = vunpack.c.l.b16 %v2144
    %v2344 = vunpack.c.l.b16 %v2145
    %v2345 = vunpack.c.l.b16 %v2146
    %v2346 = vunpack.c.l.b16 %v2147
    %v2347 = vunpack.c.l.b16 %v2148
    %v2348 = vunpack.c.l.b16 %v2149
    %v2349 = vunpack.c.l.b16 %v2150
    %v2350 = vunpack.c.l.b16 %v2151
    %v2351 = vunpack.c.l.b16 %v2152
    %v2352 = vunpack.c.l.b16 %v2153
    %v2353 = vunpack.c.l.b16 %v2154
    %v2354 = vunpack.c.l.b16 %v2155
    %v2355 = vunpack.c.l.b16 %v2156
    %v2356 = vunpack.c.l.b16 %v2157
    %v2357 = vunpack.c.l.b16 %v2158
    %v2358 = vunpack.c.l.b16 %v2159
    %v2359 = vunpack.c.l.b16 %v2160
    %v2360 = vunpack.c.l.b16 %v2161
    %v2361 = vunpack.c.l.b16 %v2162
    %v2362 = vunpack.c.l.b16 %v2163
    %v2363 = vunpack.c.l.b16 %v2164
    %v2364 = vunpack.c.l.b16 %v2165
    %v2365 = vunpack.c.l.b16 %v2166
    %v2366 = vunpack.c.l.b16 %v2167
    %v2367 = vunpack.c.l.b16 %v2168
    %v2368 = vunpack.c.l.b16 %v2169
    %v2369 = vunpack.c.l.b16 %v2170
    %v2370 = vunpack.c.l.b16 %v2171
    %v2371 = vunpack.c.l.b16 %v2172
    %v2372 = vunpack.c.l.b16 %v2173
    %v2373 = vunpack.c.l.b16 %v2174
    %v2374 = vunpack.c.l.b16 %v2175
    %v2375 = vunpack.c.l.b16 %v2176
    %v2376 = vunpack.c.l.b16 %v2177
    %v2377 = vunpack.c.l.b16 %v2178
    %v2378 = vunpack.c.l.b16 %v2179
    %v2379 = vunpack.c.l.b16 %v2180
    %v2380 = vunpack.c.l.b16 %v2181
    %v2381 = vunpack.c.l.b16 %v2182
    %v2382 = vunpack.c.l.b16 %v2183
    %v2383 = vunpack.c.l.b16 %v2184
    %v2384 = vunpack.c.l.b16 %v2185
    %v2385 = vunpack.c.l.b16 %v2186
    %v2386 = vunpack.c.l.b16 %v2187
    %v2387 = vunpack.c.l.b16 %v2188
    %v2388 = vunpack.c.l.b16 %v2189
    %v2389 = vunpack.c.l.b16 %v2190
    %v2390 = vunpack.c.l.b16 %v2191
    %v2391 = vunpack.c.l.b16 %v2192
    %v2392 = vunpack.c.l.b16 %v2193
    %v2393 = vunpack.c.l.b16 %v2194
    %v2394 = vunpack.c.l.b16 %v2195
    %v2395 = vunpack.c.l.b16 %v2196
    %v2396 = vunpack.c.l.b16 %v2197
    %v2397 = vunpack.c.l.b16 %v2198
    %v2398 = vunpack.c.l.b16 %v2199
    %v2399 = vunpack.c.l.b16 %v2200
    %v2400 = vunpack.c.l.b16 %v2201
    %v2401 = vunpack.c.l.b16 %v2202
    %v2402 = vunpack.c.l.b16 %v2203
    %v2403 = vunpack.c.l.b16 %v2204
    %v2404 = vunpack.c.l.b16 %v2205
    %v2405 = vunpack.c.l.b16 %v2206
    %v2406 = vunpack.c.l.b16 %v2207
    %v2407 = vunpack.c.l.b16 %v2208
    %v2408 = vunpack.c.l.b16 %v2209
    %v2409 = vunpack.c.l.b16 %v2210
    %v2410 = vunpack.c.l.b16 %v2211
    %v2411 = vunpack.c.l.b16 %v2212
    %v2412 = vunpack.c.l.b16 %v2213
    %v2413 = vunpack.c.l.b16 %v2214
    %v2414 = vunpack.c.l.b16 %v2215
    %v2415 = vunpack.c.l.b16 %v2216
    %v2416 = vunpack.c.l.b16 %v2217
    %v2417 = vunpack.c.l.b16 %v2218
    %v2418 = vunpack.c.l.b16 %v2219
    %v2419 = vunpack.c.l.b16 %v2220
    %v2420 = vunpack.c.l.b16 %v2221
    %v2421 = vunpack.c.l.b16 %v2222
    %v2422 = vunpack.c.l.b16 %v2223
    %v2423 = vunpack.c.l.b16 %v2224
    %v2424 = vunpack.c.l.b16 %v2225
    %v2425 = vunpack.c.l.b16 %v2226
    %v2426 = vunpack.c.l.b16 %v2227
    %v2427 = vpack.c.b16 %v2332, %v2331
    %v2428 = vpack.c.b16 %v2334, %v2333
    %v2429 = vpack.c.b16 %v2336, %v2335
    %v2430 = vpack.c.b16 %v2338, %v2337
    %v2431 = vpack.c.b16 %v2340, %v2339
    %v2432 = vpack.c.b16 %v2342, %v2341
    %v2433 = vpack.c.b16 %v2344, %v2343
    %v2434 = vpack.c.b16 %v2346, %v2345
    %v2435 = vpack.c.b16 %v2348, %v2347
    %v2436 = vpack.c.b16 %v2350, %v2349
    %v2437 = vpack.c.b16 %v2352, %v2351
    %v2438 = vpack.c.b16 %v2354, %v2353
    %v2439 = vpack.c.b16 %v2356, %v2355
    %v2440 = vpack.c.b16 %v2358, %v2357
    %v2441 = vpack.c.b16 %v2360, %v2359
    %v2442 = vpack.c.b16 %v2362, %v2361
    %v2443 = vpack.c.b16 %v2364, %v2363
    %v2444 = vpack.c.b16 %v2366, %v2365
    %v2445 = vpack.c.b16 %v2368, %v2367
    %v2446 = vpack.c.b16 %v2370, %v2369
    %v2447 = vpack.c.b16 %v2372, %v2371
    %v2448 = vpack.c.b16 %v2374, %v2373
    %v2449 = vpack.c.b16 %v2376, %v2375
    %v2450 = vpack.c.b16 %v2378, %v2377
    %v2451 = vpack.c.b16 %v2380, %v2379
    %v2452 = vpack.c.b16 %v2382, %v2381
    %v2453 = vpack.c.b16 %v2384, %v2383
    %v2454 = vpack.c.b16 %v2386, %v2385
    %v2455 = vpack.c.b16 %v2388, %v2387
    %v2456 = vpack.c.b16 %v2390, %v2389
    %v2457 = vpack.c.b16 %v2392, %v2391
    %v2458 = vpack.c.b16 %v2394, %v2393
    %v2459 = vpack.c.b16 %v2396, %v2395
    %v2460 = vpack.c.b16 %v2398, %v2397
    %v2461 = vpack.c.b16 %v2400, %v2399
    %v2462 = vpack.c.b16 %v2402, %v2401
    %v2463 = vpack.c.b16 %v2404, %v2403
    %v2464 = vpack.c.b16 %v2406, %v2405
    %v2465 = vpack.c.b16 %v2408, %v2407
    %v2466 = vpack.c.b16 %v2410, %v2409
    %v2467 = vpack.c.b16 %v2412, %v2411
    %v2468 = vpack.c.b16 %v2414, %v2413
    %v2469 = vpack.c.b16 %v2416, %v2415
    %v2470 = vpack.c.b16 %v2418, %v2417
    %v2471 = vpack.c.b16 %v2420, %v2419
    %v2472 = vpack.c.b16 %v2422, %v2421
    %v2473 = vpack.c.b16 %v2424, %v2423
    %v2474 = vpack.c.b16 %v2426, %v2425
    %2523 = vmatprep.subr.bf16.mxu0 0
    %2524 = vmatpush1.bf16.msra.mxu0 %v2427
    %2525 = vmatprep.subr.bf16.mxu0 0
    %2526 = vmatpush1.bf16.msra.mxu0 %v2428
    %2527 = vmatprep.subr.bf16.mxu0 0
    %2528 = vmatpush1.bf16.msra.mxu0 %v2429
    %2529 = vmatprep.subr.bf16.mxu0 0
    %2530 = vmatpush1.bf16.msra.mxu0 %v2430
    %2531 = vmatprep.subr.bf16.mxu0 0
    %2532 = vmatpush1.bf16.msra.mxu0 %v2431
    %2533 = vmatprep.subr.bf16.mxu0 0
    %2534 = vmatpush1.bf16.msra.mxu0 %v2432
    %2535 = vmatprep.subr.bf16.mxu0 0
    %2536 = vmatpush1.bf16.msra.mxu0 %v2433
    %2537 = vmatprep.subr.bf16.mxu0 0
    %2538 = vmatpush1.bf16.msra.mxu0 %v2434
    %2539 = vmatprep.subr.bf16.mxu0 0
    %2540 = vmatpush1.bf16.msra.mxu0 %v2435
    %2541 = vmatprep.subr.bf16.mxu0 0
    %2542 = vmatpush1.bf16.msra.mxu0 %v2436
    %2543 = vmatprep.subr.bf16.mxu0 0
    %2544 = vmatpush1.bf16.msra.mxu0 %v2437
    %2545 = vmatprep.subr.bf16.mxu0 0
    %2546 = vmatpush1.bf16.msra.mxu0 %v2438
    %2547 = vmatprep.subr.bf16.mxu0 0
    %2548 = vmatpush1.bf16.msra.mxu0 %v2439
    %2549 = vmatprep.subr.bf16.mxu0 0
    %2550 = vmatpush1.bf16.msra.mxu0 %v2440
    %2551 = vmatprep.subr.bf16.mxu0 0
    %2552 = vmatpush1.bf16.msra.mxu0 %v2441
    %2553 = vmatprep.subr.bf16.mxu0 0
    %2554 = vmatpush1.bf16.msra.mxu0 %v2442
    %2555 = vmatprep.mubr.bf16.mxu0 %v2129
    %2556 = vmatmul.mubr.bf16.gmra.mrb[0].mxu0 %v2128
    %v2557 = vpop.f32.mrb[0].mxu0
    %v2558 = vadd.f32 %v2233, %v2557
    %v2559 = vpop.f32.mrb[0].mxu0
    %v2560 = vpop.f32.mrb[0].mxu0
    %v2561 = vpop.f32.mrb[0].mxu0
    %2562 = vdwg.mxu0
    %2563 = vmatprep.subr.bf16.mxu0 0
    %2564 = vmatpush1.bf16.msra.mxu0 %v2443
    %2565 = vmatprep.subr.bf16.mxu0 0
    %2566 = vmatpush1.bf16.msra.mxu0 %v2444
    %2567 = vmatprep.subr.bf16.mxu0 0
    %2568 = vmatpush1.bf16.msra.mxu0 %v2445
    %2569 = vmatprep.subr.bf16.mxu0 0
    %2570 = vmatpush1.bf16.msra.mxu0 %v2446
    %2571 = vmatprep.subr.bf16.mxu0 0
    %2572 = vmatpush1.bf16.msra.mxu0 %v2447
    %2573 = vmatprep.subr.bf16.mxu0 0
    %2574 = vmatpush1.bf16.msra.mxu0 %v2448
    %2575 = vmatprep.subr.bf16.mxu0 0
    %2576 = vmatpush1.bf16.msra.mxu0 %v2449
    %2577 = vmatprep.subr.bf16.mxu0 0
    %2578 = vmatpush1.bf16.msra.mxu0 %v2450
    %2579 = vmatprep.subr.bf16.mxu0 0
    %2580 = vmatpush1.bf16.msra.mxu0 %v2451
    %2581 = vmatprep.subr.bf16.mxu0 0
    %2582 = vmatpush1.bf16.msra.mxu0 %v2452
    %2583 = vmatprep.subr.bf16.mxu0 0
    %2584 = vmatpush1.bf16.msra.mxu0 %v2453
    %2585 = vmatprep.subr.bf16.mxu0 0
    %2586 = vmatpush1.bf16.msra.mxu0 %v2454
    %2587 = vmatprep.subr.bf16.mxu0 0
    %2588 = vmatpush1.bf16.msra.mxu0 %v2455
    %2589 = vmatprep.subr.bf16.mxu0 0
    %2590 = vmatpush1.bf16.msra.mxu0 %v2456
    %2591 = vmatprep.subr.bf16.mxu0 0
    %2592 = vmatpush1.bf16.msra.mxu0 %v2457
    %2593 = vmatprep.subr.bf16.mxu0 0
    %2594 = vmatpush1.bf16.msra.mxu0 %v2458
    %2595 = vmatprep.mubr.bf16.mxu0 %v2131
    %2596 = vmatmul.mubr.bf16.gmra.mrb[0].mxu0 %v2130
    %v2597 = vpop.f32.mrb[0].mxu0
    %v2598 = vadd.f32 %v2558, %v2597
    %v2599 = vpop.f32.mrb[0].mxu0
    %v2600 = vpop.f32.mrb[0].mxu0
    %v2601 = vpop.f32.mrb[0].mxu0
    %2602 = vdwg.mxu0
    %2603 = vmatprep.subr.bf16.mxu0 0
    %2604 = vmatpush1.bf16.msra.mxu0 %v2459
    %2605 = vmatprep.subr.bf16.mxu0 0
    %2606 = vmatpush1.bf16.msra.mxu0 %v2460
    %2607 = vmatprep.subr.bf16.mxu0 0
    %2608 = vmatpush1.bf16.msra.mxu0 %v2461
    %2609 = vmatprep.subr.bf16.mxu0 0
    %2610 = vmatpush1.bf16.msra.mxu0 %v2462
    %2611 = vmatprep.subr.bf16.mxu0 0
    %2612 = vmatpush1.bf16.msra.mxu0 %v2463
    %2613 = vmatprep.subr.bf16.mxu0 0
    %2614 = vmatpush1.bf16.msra.mxu0 %v2464
    %2615 = vmatprep.subr.bf16.mxu0 0
    %2616 = vmatpush1.bf16.msra.mxu0 %v2465
    %2617 = vmatprep.subr.bf16.mxu0 0
    %2618 = vmatpush1.bf16.msra.mxu0 %v2466
    %2619 = vmatprep.subr.bf16.mxu0 0
    %2620 = vmatpush1.bf16.msra.mxu0 %v2467
    %2621 = vmatprep.subr.bf16.mxu0 0
    %2622 = vmatpush1.bf16.msra.mxu0 %v2468
    %2623 = vmatprep.subr.bf16.mxu0 0
    %2624 = vmatpush1.bf16.msra.mxu0 %v2469
    %2625 = vmatprep.subr.bf16.mxu0 0
    %2626 = vmatpush1.bf16.msra.mxu0 %v2470
    %2627 = vmatprep.subr.bf16.mxu0 0
    %2628 = vmatpush1.bf16.msra.mxu0 %v2471
    %2629 = vmatprep.subr.bf16.mxu0 0
    %2630 = vmatpush1.bf16.msra.mxu0 %v2472
    %2631 = vmatprep.subr.bf16.mxu0 0
    %2632 = vmatpush1.bf16.msra.mxu0 %v2473
    %2633 = vmatprep.subr.bf16.mxu0 0
    %2634 = vmatpush1.bf16.msra.mxu0 %v2474
    %2635 = vmatprep.mubr.bf16.mxu0 %v2127
    %2636 = vmatmul.mubr.bf16.gmra.mrb[0].mxu0 %v2126
    %v2637 = vpop.f32.mrb[0].mxu0
    %v2638 = vadd.f32 %v2598, %v2637
    %v2639 = vpop.f32.mrb[0].mxu0
    %v2640 = vpop.f32.mrb[0].mxu0
    %v2641 = vpop.f32.mrb[0].mxu0
    %2642 = vdwg.mxu0
    %v2643 = vmax.f32 %v2638, 0.0
    %v2644 = vpack.c.bf16 %v2643, %v2643
    %v2645 = vld [vmem:[%s12] sm:$0xf]
    %v2646 = vld [vmem:[%s12 + $0x4] sm:$0xf]
    %v2647 = vld [vmem:[%s12 + $0x8] sm:$0xf]
    %v2648 = vld [vmem:[%s12 + $0xc] sm:$0xf]
    %v2649 = vld [vmem:[%s12 + $0x10] sm:$0xf]
    %v2650 = vld [vmem:[%s12 + $0x14] sm:$0xf]
    %v2651 = vld [vmem:[%s12 + $0x18] sm:$0xf]
    %v2652 = vld [vmem:[%s12 + $0x1c] sm:$0xf]
    %v2653 = vld [vmem:[%s12 + $0x20] sm:$0xf]
    %v2654 = vld [vmem:[%s12 + $0x24] sm:$0xf]
    %v2655 = vld [vmem:[%s12 + $0x28] sm:$0xf]
    %v2656 = vld [vmem:[%s12 + $0x2c] sm:$0xf]
    %v2657 = vld [vmem:[%s12 + $0x30] sm:$0xf]
    %v2658 = vld [vmem:[%s12 + $0x34] sm:$0xf]
    %v2659 = vld [vmem:[%s12 + $0x38] sm:$0xf]
    %v2660 = vld [vmem:[%s12 + $0x3c] sm:$0xf]
    %v2661 = vld [vmem:[%s13] sm:$0x1]
    %v2663 = vlaneseq
    %v2664 = vshrl.u32 %v2663, 7
    %v2665 = vsub.s32 0, %v2664
    %v2666 = vrot.slane %v2661, %v2665
    %v2684 = vunpack.c.l.b16 %v2645
    %v2685 = vunpack.c.l.b16 %v2646
    %v2686 = vunpack.c.l.b16 %v2647
    %v2687 = vunpack.c.l.b16 %v2648
    %v2688 = vunpack.c.l.b16 %v2649
    %v2689 = vunpack.c.l.b16 %v2650
    %v2690 = vunpack.c.l.b16 %v2651
    %v2691 = vunpack.c.l.b16 %v2652
    %v2692 = vunpack.c.l.b16 %v2653
    %v2693 = vunpack.c.l.b16 %v2654
    %v2694 = vunpack.c.l.b16 %v2655
    %v2695 = vunpack.c.l.b16 %v2656
    %v2696 = vunpack.c.l.b16 %v2657
    %v2697 = vunpack.c.l.b16 %v2658
    %v2698 = vunpack.c.l.b16 %v2659
    %v2699 = vunpack.c.l.b16 %v2660
    %v2700 = vpack.c.b16 %v2685, %v2684
    %v2701 = vpack.c.b16 %v2687, %v2686
    %v2702 = vpack.c.b16 %v2689, %v2688
    %v2703 = vpack.c.b16 %v2691, %v2690
    %v2704 = vpack.c.b16 %v2693, %v2692
    %v2705 = vpack.c.b16 %v2695, %v2694
    %v2706 = vpack.c.b16 %v2697, %v2696
    %v2707 = vpack.c.b16 %v2699, %v2698
    %2716 = vmatprep.subr.bf16.mxu0 0
    %2717 = vmatpush1.bf16.msra.mxu0 %v2700
    %2718 = vmatprep.subr.bf16.mxu0 0
    %2719 = vmatpush1.bf16.msra.mxu0 %v2701
    %2720 = vmatprep.subr.bf16.mxu0 0
    %2721 = vmatpush1.bf16.msra.mxu0 %v2702
    %2722 = vmatprep.subr.bf16.mxu0 0
    %2723 = vmatpush1.bf16.msra.mxu0 %v2703
    %2724 = vmatprep.subr.bf16.mxu0 0
    %2725 = vmatpush1.bf16.msra.mxu0 %v2704
    %2726 = vmatprep.subr.bf16.mxu0 0
    %2727 = vmatpush1.bf16.msra.mxu0 %v2705
    %2728 = vmatprep.subr.bf16.mxu0 0
    %2729 = vmatpush1.bf16.msra.mxu0 %v2706
    %2730 = vmatprep.subr.bf16.mxu0 0
    %2731 = vmatpush1.bf16.msra.mxu0 %v2707
    %2732 = vmatprep.subr.bf16.mxu0 0
    %2733 = vmatpush1.bf16.msra.mxu0 0
    %2734 = vmatprep.subr.bf16.mxu0 0
    %2735 = vmatpush1.bf16.msra.mxu0 0
    %2736 = vmatprep.subr.bf16.mxu0 0
    %2737 = vmatpush1.bf16.msra.mxu0 0
    %2738 = vmatprep.subr.bf16.mxu0 0
    %2739 = vmatpush1.bf16.msra.mxu0 0
    %2740 = vmatprep.subr.bf16.mxu0 0
    %2741 = vmatpush1.bf16.msra.mxu0 0
    %2742 = vmatprep.subr.bf16.mxu0 0
    %2743 = vmatpush1.bf16.msra.mxu0 0
    %2744 = vmatprep.subr.bf16.mxu0 0
    %2745 = vmatpush1.bf16.msra.mxu0 0
    %2746 = vmatprep.subr.bf16.mxu0 0
    %2747 = vmatpush1.bf16.msra.mxu0 0
    %2748 = vmatprep.mubr.bf16.mxu0 0
    %2749 = vmatmul.mubr.bf16.gmra.mrb[0].mxu0 %v2644
    %v2750 = vpop.f32.mrb[0].mxu0
    %v2751 = vadd.f32 %v2666, %v2750
    %v2752 = vpop.f32.mrb[0].mxu0
    %v2753 = vpop.f32.mrb[0].mxu0
    %v2754 = vpop.f32.mrb[0].mxu0
    %2755 = vdwg.mxu0
    %v2756 = vmax.f32 %v2751, 0.0
    %v2757 = vpack.c.bf16 %v2756, %v2756
    %v2758 = vld [vmem:[%s14] sm:$0xf]
    %v2759 = vld [vmem:[%s14 + $0x4] sm:$0xf]
    %v2760 = vld [vmem:[%s14 + $0x8] sm:$0xf]
    %v2761 = vld [vmem:[%s14 + $0xc] sm:$0xf]
    %v2762 = vld [vmem:[%s14 + $0x10] sm:$0xf]
    %v2763 = vld [vmem:[%s14 + $0x14] sm:$0xf]
    %v2764 = vld [vmem:[%s14 + $0x18] sm:$0xf]
    %v2765 = vld [vmem:[%s14 + $0x1c] sm:$0xf]
    %v2766 = vld [vmem:[%s14 + $0x20] sm:$0xf]
    %v2767 = vld [vmem:[%s14 + $0x24] sm:$0xf]
    %v2768 = vld [vmem:[%s14 + $0x28] sm:$0xf]
    %v2769 = vld [vmem:[%s14 + $0x2c] sm:$0xf]
    %v2770 = vld [vmem:[%s14 + $0x30] sm:$0xf]
    %v2771 = vld [vmem:[%s14 + $0x34] sm:$0xf]
    %v2772 = vld [vmem:[%s14 + $0x38] sm:$0xf]
    %v2773 = vld [vmem:[%s14 + $0x3c] sm:$0xf]
    %v2774 = vld [vmem:[%s15] sm:$0x1]
    %v2776 = vlaneseq
    %v2777 = vshrl.u32 %v2776, 7
    %v2778 = vsub.s32 0, %v2777
    %v2779 = vrot.slane %v2774, %v2778
    %v2797 = vunpack.c.l.b16 %v2758
    %v2798 = vunpack.c.l.b16 %v2759
    %v2799 = vunpack.c.l.b16 %v2760
    %v2800 = vunpack.c.l.b16 %v2761
    %v2801 = vunpack.c.l.b16 %v2762
    %v2802 = vunpack.c.l.b16 %v2763
    %v2803 = vunpack.c.l.b16 %v2764
    %v2804 = vunpack.c.l.b16 %v2765
    %v2805 = vunpack.c.l.b16 %v2766
    %v2806 = vunpack.c.l.b16 %v2767
    %v2807 = vunpack.c.l.b16 %v2768
    %v2808 = vunpack.c.l.b16 %v2769
    %v2809 = vunpack.c.l.b16 %v2770
    %v2810 = vunpack.c.l.b16 %v2771
    %v2811 = vunpack.c.l.b16 %v2772
    %v2812 = vunpack.c.l.b16 %v2773
    %v2813 = vpack.c.b16 %v2798, %v2797
    %v2814 = vpack.c.b16 %v2800, %v2799
    %v2815 = vpack.c.b16 %v2802, %v2801
    %v2816 = vpack.c.b16 %v2804, %v2803
    %v2817 = vpack.c.b16 %v2806, %v2805
    %v2818 = vpack.c.b16 %v2808, %v2807
    %v2819 = vpack.c.b16 %v2810, %v2809
    %v2820 = vpack.c.b16 %v2812, %v2811
    %2829 = vmatprep.subr.bf16.mxu0 0
    %2830 = vmatpush1.bf16.msra.mxu0 %v2813
    %2831 = vmatprep.subr.bf16.mxu0 0
    %2832 = vmatpush1.bf16.msra.mxu0 %v2814
    %2833 = vmatprep.subr.bf16.mxu0 0
    %2834 = vmatpush1.bf16.msra.mxu0 %v2815
    %2835 = vmatprep.subr.bf16.mxu0 0
    %2836 = vmatpush1.bf16.msra.mxu0 %v2816
    %2837 = vmatprep.subr.bf16.mxu0 0
    %2838 = vmatpush1.bf16.msra.mxu0 %v2817
    %2839 = vmatprep.subr.bf16.mxu0 0
    %2840 = vmatpush1.bf16.msra.mxu0 %v2818
    %2841 = vmatprep.subr.bf16.mxu0 0
    %2842 = vmatpush1.bf16.msra.mxu0 %v2819
    %2843 = vmatprep.subr.bf16.mxu0 0
    %2844 = vmatpush1.bf16.msra.mxu0 %v2820
    %2845 = vmatprep.subr.bf16.mxu0 0
    %2846 = vmatpush1.bf16.msra.mxu0 0
    %2847 = vmatprep.subr.bf16.mxu0 0
    %2848 = vmatpush1.bf16.msra.mxu0 0
    %2849 = vmatprep.subr.bf16.mxu0 0
    %2850 = vmatpush1.bf16.msra.mxu0 0
    %2851 = vmatprep.subr.bf16.mxu0 0
    %2852 = vmatpush1.bf16.msra.mxu0 0
    %2853 = vmatprep.subr.bf16.mxu0 0
    %2854 = vmatpush1.bf16.msra.mxu0 0
    %2855 = vmatprep.subr.bf16.mxu0 0
    %2856 = vmatpush1.bf16.msra.mxu0 0
    %2857 = vmatprep.subr.bf16.mxu0 0
    %2858 = vmatpush1.bf16.msra.mxu0 0
    %2859 = vmatprep.subr.bf16.mxu0 0
    %2860 = vmatpush1.bf16.msra.mxu0 0
    %2861 = vmatprep.mubr.bf16.mxu0 0
    %2862 = vmatmul.mubr.bf16.gmra.mrb[0].mxu0 %v2757
    %v2863 = vpop.f32.mrb[0].mxu0
    %v2864 = vadd.f32 %v2779, %v2863
    %v2865 = vpop.f32.mrb[0].mxu0
    %v2866 = vpop.f32.mrb[0].mxu0
    %v2867 = vpop.f32.mrb[0].mxu0
    %2868 = vdwg.mxu0
    %2869 = vst [vmem:[%s16] sm:$0xff] %v2864
    // Predicated region
    $region86: #{net_forward.1} parent=1 // pred_check
      _
    $region87: #{net_forward.1} parent=1 // pred_check_branch
      %2871 = sbr.rel (0) target = $region89
    $region88: #{net_forward.1} parent=1 // pred_region
      _
    $region89: #{net_forward.1} parent=1 // pred_fallthru
      _
    // Predicated region
    $region90: #{net_forward.1} parent=1 // pred_check
      _
    $region91: #{net_forward.1} parent=1 // pred_check_branch
      %2873 = sbr.rel (0) target = $region93
    $region92: #{net_forward.1} parent=1 // pred_region
      _
    $region93: #{net_forward.1} parent=1 // pred_fallthru
      _
    %2874 = vsyncpa [#allocation3], 1
    %2875 = vsyncpa [#allocation5], 1
    %2876 = vsyncpa [#allocation8], 1

</llo_original>
